<compile_context>
chip_gen: v7x
topology: tpu7x:2x2x1
jax: 0.10.0
libtpu: 0.0.40
codegen_flags: <defaults>
</compile_context>

<pallas_src>
import jax
import jax.numpy as jnp
from jax.experimental import pallas as pl
from jax.experimental.pallas import tpu as pltpu


def _round_up(x, m):
    return (x + m - 1) // m * m


def lin_kernel(x_ref, w1_ref, b1_ref, w2_ref, b2_ref,
               wf_ref, bf_ref, wo_ref, bo_ref, out_ref):
    # ---- Layer 1: one fused (TB, 640) @ (640, 512) bf16 matmul ----
    h1 = jnp.maximum(
        jnp.dot(x_ref[...], w1_ref[...],
                preferred_element_type=jnp.float32) + b1_ref[...], 0.0)

    # ---- Layers 2..4: bf16 MXU matmuls, f32 accumulate / bias / ReLU ----
    h2 = jnp.maximum(
        jnp.dot(h1.astype(jnp.bfloat16), w2_ref[...],
                preferred_element_type=jnp.float32) + b2_ref[...], 0.0)
    h3 = jnp.maximum(
        jnp.dot(h2.astype(jnp.bfloat16), wf_ref[...],
                preferred_element_type=jnp.float32) + bf_ref[...], 0.0)
    logits = jnp.maximum(
        jnp.dot(h3.astype(jnp.bfloat16), wo_ref[...],
                preferred_element_type=jnp.float32) + bo_ref[...], 0.0)

    # ---- Softmax over the class axis (nn.Softmax(1)), numerically stable ----
    m = jnp.max(logits, axis=1, keepdims=True)
    e = jnp.exp(logits - m)
    s = jnp.sum(e, axis=1, keepdims=True)
    out_ref[...] = e * pl.reciprocal(s)   # exact reciprocal on the EUP


def lin_forward(tokens, params, *, block_b=None):
    emb_table, w1, b1, w2, b2, wf, bf, wo, bo = params
    B, L = tokens.shape
    V, D = emb_table.shape
    K = L * D
    H1, H2, H3, C = w1.shape[1], w2.shape[1], wf.shape[1], wo.shape[1]

    # Batch tile: multiple of 8 (sublanes), capped at 512.  When the batch is
    # big enough, split into >= 2 tiles so v7x's two TensorCores both get work.
    if block_b is None:
        b8 = _round_up(B, 8)
        block_b = min(512, b8 if b8 < 16 else _round_up((b8 + 1) // 2, 8))
    TB = block_b
    Bp = _round_up(B, TB)

    # Clamp (mirrors embedding-lookup safety) and pad the batch.
    tokens = jnp.clip(tokens.astype(jnp.int32), 0, V - 1)
    if Bp != B:
        tokens = jnp.pad(tokens, ((0, Bp - B), (0, 0)))

    # Pre-gather in the wrapper: (Bp, L*D) bf16, lane-dense (640 = 5*128).
    emb_bf16 = emb_table.astype(jnp.bfloat16)
    x = jnp.take(emb_bf16, tokens, axis=0).reshape(Bp, K)

    # Weights to bf16; biases stay f32.
    w1_b = w1.astype(jnp.bfloat16)
    w2_b = w2.astype(jnp.bfloat16)
    wf_b = wf.astype(jnp.bfloat16)
    wo_b = wo.astype(jnp.bfloat16)

    out = pl.pallas_call(
        lin_kernel,
        out_shape=jax.ShapeDtypeStruct((Bp, C), jnp.float32),
        grid=(Bp // TB,),
        in_specs=[
            pl.BlockSpec((TB, K), lambda i: (i, 0)),   # activations (tiled)
            pl.BlockSpec((K, H1), lambda i: (0, 0)),   # w1 (VMEM-resident)
            pl.BlockSpec((1, H1), lambda i: (0, 0)),   # b1
            pl.BlockSpec((H1, H2), lambda i: (0, 0)),  # w2
            pl.BlockSpec((1, H2), lambda i: (0, 0)),   # b2
            pl.BlockSpec((H2, H3), lambda i: (0, 0)),  # wf
            pl.BlockSpec((1, H3), lambda i: (0, 0)),   # bf
            pl.BlockSpec((H3, C), lambda i: (0, 0)),   # wo
            pl.BlockSpec((1, C), lambda i: (0, 0)),    # bo
        ],
        out_specs=pl.BlockSpec((TB, C), lambda i: (i, 0)),
        compiler_params=pltpu.CompilerParams(
            dimension_semantics=("parallel",)),        # megacore split on v7x
    )(x, w1_b, b1, w2_b, b2, wf_b, bf, wo_b, bo)
    return out[:B]


def lin_reference(tokens, params):
    """Pure-JAX reference using the same bf16 casts as the kernel."""
    emb_table, w1, b1, w2, b2, wf, bf, wo, bo = params
    B, L = tokens.shape
    D = emb_table.shape[1]
    x = jnp.take(emb_table.astype(jnp.bfloat16), tokens, axis=0).reshape(B, L * D)

    def layer(x, w, b):
        y = jnp.dot(x.astype(jnp.bfloat16), w.astype(jnp.bfloat16),
                    preferred_element_type=jnp.float32) + b
        return jnp.maximum(y, 0.0)

    h = layer(x, w1, b1)
    h = layer(h, w2, b2)
    h = layer(h, wf, bf)
    logits = layer(h, wo, bo)
    return jax.nn.softmax(logits, axis=1)


def init_params(key, vocab_size, embedding_dim, max_length):
    def linear_init(k, fan_in, fan_out):
        # Mimic torch.nn.Linear init: U(-1/sqrt(fan_in), 1/sqrt(fan_in)).
        kw, kb = jax.random.split(k)
        bound = 1.0 / jnp.sqrt(fan_in)
        w = jax.random.uniform(kw, (fan_in, fan_out), jnp.float32, -bound, bound)
        b = jax.random.uniform(kb, (1, fan_out), jnp.float32, -bound, bound)
        return w, b

    k_emb, k1, k2, k3, k4 = jax.random.split(key, 5)
    emb_table = jax.random.normal(k_emb, (vocab_size, embedding_dim), jnp.float32)
    flat = max_length * embedding_dim
    w1, b1 = linear_init(k1, flat, 512)
    w2, b2 = linear_init(k2, 512, 128)
    wf, bf = linear_init(k3, 128, 32)
    wo, bo = linear_init(k4, 32, 6)
    return (emb_table, w1, b1, w2, b2, wf, bf, wo, bo)


if __name__ == "__main__":
    vocab_size = 100
    embedding_dim = 32
    max_length = 20
    batch = 8

    key = jax.random.PRNGKey(0)
    k_params, k_tokens = jax.random.split(key)

    params = init_params(k_params, vocab_size, embedding_dim, max_length)
    tokens = jax.random.randint(k_tokens, (batch, max_length), 0, vocab_size,
                                dtype=jnp.int32)

    probs = lin_forward(tokens, params)
    jax.block_until_ready(probs)

    ref = lin_reference(tokens, params)

    assert probs.shape == (batch, 6)
    # Softmax rows sum to ~1 (bf16 matmuls -> modest tolerance).
    assert bool(jnp.allclose(jnp.sum(probs, axis=1), 1.0, atol=1e-3))
    assert bool(jnp.allclose(probs, ref, atol=1e-2, rtol=1e-2))

    print("KERNEL_OK")
</pallas_src>

<mosaic_0001>
module attributes {stable_mosaic.version = 11 : i64} {
  func.func @lin_kernel(%arg0: i32, %arg1: memref<8x640xbf16, #tpu.memory_space<vmem>>, %arg2: memref<640x512xbf16, #tpu.memory_space<vmem>>, %arg3: memref<1x512xf32, #tpu.memory_space<vmem>>, %arg4: memref<512x128xbf16, #tpu.memory_space<vmem>>, %arg5: memref<1x128xf32, #tpu.memory_space<vmem>>, %arg6: memref<128x32xbf16, #tpu.memory_space<vmem>>, %arg7: memref<1x32xf32, #tpu.memory_space<vmem>>, %arg8: memref<32x6xbf16, #tpu.memory_space<vmem>>, %arg9: memref<1x6xf32, #tpu.memory_space<vmem>>, %arg10: memref<8x6xf32, #tpu.memory_space<vmem>>) attributes {dimension_semantics = [#tpu.dimension_semantics<parallel>], iteration_bounds = array<i64: 1>, scalar_prefetch = 0 : i64, scratch_operands = 0 : i64, tpu.core_type = #tpu.core_type<tc>, window_params = [{transform_indices = @transform_0, window_bounds = array<i64: 8, 640>}, {pipeline_mode = #tpu.pipeline_mode<synchronous>, transform_indices = @transform_1, window_bounds = array<i64: 640, 512>}, {pipeline_mode = #tpu.pipeline_mode<synchronous>, transform_indices = @transform_2, window_bounds = array<i64: 1, 512>}, {pipeline_mode = #tpu.pipeline_mode<synchronous>, transform_indices = @transform_3, window_bounds = array<i64: 512, 128>}, {pipeline_mode = #tpu.pipeline_mode<synchronous>, transform_indices = @transform_4, window_bounds = array<i64: 1, 128>}, {pipeline_mode = #tpu.pipeline_mode<synchronous>, transform_indices = @transform_5, window_bounds = array<i64: 128, 32>}, {pipeline_mode = #tpu.pipeline_mode<synchronous>, transform_indices = @transform_6, window_bounds = array<i64: 1, 32>}, {pipeline_mode = #tpu.pipeline_mode<synchronous>, transform_indices = @transform_7, window_bounds = array<i64: 32, 6>}, {pipeline_mode = #tpu.pipeline_mode<synchronous>, transform_indices = @transform_8, window_bounds = array<i64: 1, 6>}, {transform_indices = @transform_9, window_bounds = array<i64: 8, 6>}]} {
    %c0 = arith.constant 0 : index
    %c0_0 = arith.constant 0 : index
    %0 = vector.load %arg1[%c0, %c0_0] : memref<8x640xbf16, #tpu.memory_space<vmem>>, vector<8x640xbf16>
    %c0_1 = arith.constant 0 : index
    %c0_2 = arith.constant 0 : index
    %1 = vector.load %arg2[%c0_1, %c0_2] : memref<640x512xbf16, #tpu.memory_space<vmem>>, vector<640x512xbf16>
    %cst = arith.constant dense<0.000000e+00> : vector<8x512xf32>
    %2 = tpu.matmul %0, %1, %cst {dimension_numbers = #tpu.dot_dimension_numbers<[1], [0], [0], [1], [0, 0, 1, 1], [], []>} : vector<8x640xbf16>, vector<640x512xbf16>, vector<8x512xf32> -> vector<8x512xf32>
    %c0_3 = arith.constant 0 : index
    %c0_4 = arith.constant 0 : index
    %3 = vector.load %arg3[%c0_3, %c0_4] : memref<1x512xf32, #tpu.memory_space<vmem>>, vector<1x512xf32>
    %4 = vector.broadcast %3 : vector<1x512xf32> to vector<8x512xf32>
    %5 = arith.addf %2, %4 : vector<8x512xf32>
    %cst_5 = arith.constant 0.000000e+00 : f32
    %6 = vector.broadcast %cst_5 : f32 to vector<8x512xf32>
    %7 = arith.maximumf %5, %6 : vector<8x512xf32>
    %8 = arith.truncf %7 : vector<8x512xf32> to vector<8x512xbf16>
    %c0_6 = arith.constant 0 : index
    %c0_7 = arith.constant 0 : index
    %9 = vector.load %arg4[%c0_6, %c0_7] : memref<512x128xbf16, #tpu.memory_space<vmem>>, vector<512x128xbf16>
    %cst_8 = arith.constant dense<0.000000e+00> : vector<8x128xf32>
    %10 = tpu.matmul %8, %9, %cst_8 {dimension_numbers = #tpu.dot_dimension_numbers<[1], [0], [0], [1], [0, 0, 1, 1], [], []>} : vector<8x512xbf16>, vector<512x128xbf16>, vector<8x128xf32> -> vector<8x128xf32>
    %c0_9 = arith.constant 0 : index
    %c0_10 = arith.constant 0 : index
    %11 = vector.load %arg5[%c0_9, %c0_10] : memref<1x128xf32, #tpu.memory_space<vmem>>, vector<1x128xf32>
    %12 = vector.broadcast %11 : vector<1x128xf32> to vector<8x128xf32>
    %13 = arith.addf %10, %12 : vector<8x128xf32>
    %cst_11 = arith.constant 0.000000e+00 : f32
    %14 = vector.broadcast %cst_11 : f32 to vector<8x128xf32>
    %15 = arith.maximumf %13, %14 : vector<8x128xf32>
    %16 = arith.truncf %15 : vector<8x128xf32> to vector<8x128xbf16>
    %c0_12 = arith.constant 0 : index
    %c0_13 = arith.constant 0 : index
    %17 = vector.load %arg6[%c0_12, %c0_13] : memref<128x32xbf16, #tpu.memory_space<vmem>>, vector<128x32xbf16>
    %cst_14 = arith.constant dense<0.000000e+00> : vector<8x32xf32>
    %18 = tpu.matmul %16, %17, %cst_14 {dimension_numbers = #tpu.dot_dimension_numbers<[1], [0], [0], [1], [0, 0, 1, 1], [], []>} : vector<8x128xbf16>, vector<128x32xbf16>, vector<8x32xf32> -> vector<8x32xf32>
    %c0_15 = arith.constant 0 : index
    %c0_16 = arith.constant 0 : index
    %19 = vector.load %arg7[%c0_15, %c0_16] : memref<1x32xf32, #tpu.memory_space<vmem>>, vector<1x32xf32>
    %20 = vector.broadcast %19 : vector<1x32xf32> to vector<8x32xf32>
    %21 = arith.addf %18, %20 : vector<8x32xf32>
    %cst_17 = arith.constant 0.000000e+00 : f32
    %22 = vector.broadcast %cst_17 : f32 to vector<8x32xf32>
    %23 = arith.maximumf %21, %22 : vector<8x32xf32>
    %24 = arith.truncf %23 : vector<8x32xf32> to vector<8x32xbf16>
    %c0_18 = arith.constant 0 : index
    %c0_19 = arith.constant 0 : index
    %25 = vector.load %arg8[%c0_18, %c0_19] : memref<32x6xbf16, #tpu.memory_space<vmem>>, vector<32x6xbf16>
    %cst_20 = arith.constant dense<0.000000e+00> : vector<8x6xf32>
    %26 = tpu.matmul %24, %25, %cst_20 {dimension_numbers = #tpu.dot_dimension_numbers<[1], [0], [0], [1], [0, 0, 1, 1], [], []>} : vector<8x32xbf16>, vector<32x6xbf16>, vector<8x6xf32> -> vector<8x6xf32>
    %c0_21 = arith.constant 0 : index
    %c0_22 = arith.constant 0 : index
    %27 = vector.load %arg9[%c0_21, %c0_22] : memref<1x6xf32, #tpu.memory_space<vmem>>, vector<1x6xf32>
    %28 = vector.broadcast %27 : vector<1x6xf32> to vector<8x6xf32>
    %29 = arith.addf %26, %28 : vector<8x6xf32>
    %cst_23 = arith.constant 0.000000e+00 : f32
    %30 = vector.broadcast %cst_23 : f32 to vector<8x6xf32>
    %31 = arith.maximumf %29, %30 : vector<8x6xf32>
    %cst_24 = arith.constant dense<0xFF800000> : vector<8xf32>
    %32 = vector.multi_reduction <maximumf>, %31, %cst_24 [1] : vector<8x6xf32> to vector<8xf32>
    %33 = vector.shape_cast %32 : vector<8xf32> to vector<8x1xf32>
    %34 = vector.broadcast %33 : vector<8x1xf32> to vector<8x6xf32>
    %35 = arith.subf %31, %34 : vector<8x6xf32>
    %36 = math.exp %35 : vector<8x6xf32>
    %cst_25 = arith.constant dense<0.000000e+00> : vector<8xf32>
    %37 = vector.multi_reduction <add>, %36, %cst_25 [1] : vector<8x6xf32> to vector<8xf32>
    %38 = vector.shape_cast %37 : vector<8xf32> to vector<8x1xf32>
    %39 = tpu.reciprocal %38 : vector<8x1xf32> -> vector<8x1xf32>
    %40 = vector.broadcast %39 : vector<8x1xf32> to vector<8x6xf32>
    %41 = arith.mulf %36, %40 : vector<8x6xf32>
    %c0_26 = arith.constant 0 : index
    %c0_27 = arith.constant 0 : index
    %42 = vector.load %arg10[%c0_26, %c0_27] : memref<8x6xf32, #tpu.memory_space<vmem>>, vector<8x6xf32>
    tpu.vector_store %arg10[%c0_26, %c0_27], %41 {strides = array<i32>} : memref<8x6xf32, #tpu.memory_space<vmem>>, vector<8x6xf32>,
    return
  }
  func.func @transform_0(%arg0: i32) -> (i32, i32) {
    %c0_i32 = arith.constant 0 : i32
    %c0_i32_0 = arith.constant 0 : i32
    return %arg0, %c0_i32 : i32, i32
  }
  func.func @transform_1(%arg0: i32) -> (i32, i32) {
    %c0_i32 = arith.constant 0 : i32
    %c0_i32_0 = arith.constant 0 : i32
    %c0_i32_1 = arith.constant 0 : i32
    return %c0_i32, %c0_i32_0 : i32, i32
  }
  func.func @transform_2(%arg0: i32) -> (i32, i32) {
    %c0_i32 = arith.constant 0 : i32
    %c0_i32_0 = arith.constant 0 : i32
    %c0_i32_1 = arith.constant 0 : i32
    return %c0_i32, %c0_i32_0 : i32, i32
  }
  func.func @transform_3(%arg0: i32) -> (i32, i32) {
    %c0_i32 = arith.constant 0 : i32
    %c0_i32_0 = arith.constant 0 : i32
    %c0_i32_1 = arith.constant 0 : i32
    return %c0_i32, %c0_i32_0 : i32, i32
  }
  func.func @transform_4(%arg0: i32) -> (i32, i32) {
    %c0_i32 = arith.constant 0 : i32
    %c0_i32_0 = arith.constant 0 : i32
    %c0_i32_1 = arith.constant 0 : i32
    return %c0_i32, %c0_i32_0 : i32, i32
  }
  func.func @transform_5(%arg0: i32) -> (i32, i32) {
    %c0_i32 = arith.constant 0 : i32
    %c0_i32_0 = arith.constant 0 : i32
    %c0_i32_1 = arith.constant 0 : i32
    return %c0_i32, %c0_i32_0 : i32, i32
  }
  func.func @transform_6(%arg0: i32) -> (i32, i32) {
    %c0_i32 = arith.constant 0 : i32
    %c0_i32_0 = arith.constant 0 : i32
    %c0_i32_1 = arith.constant 0 : i32
    return %c0_i32, %c0_i32_0 : i32, i32
  }
  func.func @transform_7(%arg0: i32) -> (i32, i32) {
    %c0_i32 = arith.constant 0 : i32
    %c0_i32_0 = arith.constant 0 : i32
    %c0_i32_1 = arith.constant 0 : i32
    return %c0_i32, %c0_i32_0 : i32, i32
  }
  func.func @transform_8(%arg0: i32) -> (i32, i32) {
    %c0_i32 = arith.constant 0 : i32
    %c0_i32_0 = arith.constant 0 : i32
    %c0_i32_1 = arith.constant 0 : i32
    return %c0_i32, %c0_i32_0 : i32, i32
  }
  func.func @transform_9(%arg0: i32) -> (i32, i32) {
    %c0_i32 = arith.constant 0 : i32
    %c0_i32_0 = arith.constant 0 : i32
    return %arg0, %c0_i32 : i32, i32
  }
}

</mosaic_0001>

<llo_original>
// kernel: tpu_custom_call.1
$region0: #{tpu_custom_call.1}
  #allocation0 [shape = 'u32[]', space=smem, size = 0x4, offset = 0x4, fixed_abs, tag = 'smem constant byte address 0x4 - core index']
  #allocation1 [shape = 'u32[144,128]{1,0:T(1,128)}', space=vmem, size = 0x12000, scoped, tag = 'internal scratch']
  %s0 = inlined_call_operand.vmem [shape: bf16[8,640], index: 0, kind: input, shape index: {}]
  %s1 = inlined_call_operand.hbm [shape: bf16[640,512], index: 1, kind: input, shape index: {}]
  %s2 = inlined_call_operand.vmem [shape: f32[1,512], index: 2, kind: input, shape index: {}]
  %s3 = inlined_call_operand.hbm [shape: bf16[512,128], index: 3, kind: input, shape index: {}]
  %s4 = inlined_call_operand.vmem [shape: f32[1,128], index: 4, kind: input, shape index: {}]
  %s5 = inlined_call_operand.vmem [shape: bf16[128,32], index: 5, kind: input, shape index: {}]
  %s6 = inlined_call_operand.vmem [shape: f32[1,32], index: 6, kind: input, shape index: {}]
  %s7 = inlined_call_operand.vmem [shape: bf16[32,6], index: 7, kind: input, shape index: {}]
  %s8 = inlined_call_operand.vmem [shape: f32[1,6], index: 8, kind: input, shape index: {}]
  %s9 = inlined_call_operand.hbm [shape: f32[8,6], index: 9, kind: output, shape index: {}]
  %s10 = sld [smem:[#allocation0]]
  $region54: #{tpu_custom_call.1} parent=0
    _
  %s12 = ssub.s32 1, %s10
  %s13 = scalar_select 0, %s12, %s10
  $region1: #{tpu_custom_call.1} parent=0
    #allocation2 [shape = 'u8[655360]{0}', space=vmem, size = 0xa0000, scoped, tag = 'input window, operand 1, single buffered']
    #allocation3 [shape = 's32[1]{0}', space=sflag, size = 0x4, scoped, tag = 'scoped memory for tpu_custom_call.1']
    #allocation4 [shape = 's32[1]{0}', space=sflag, size = 0x4, scoped, tag = 'scoped memory for tpu_custom_call.1']
    #allocation5 [shape = 'u8[131072]{0}', space=vmem, size = 0x20000, scoped, tag = 'input window, operand 3, single buffered']
    #allocation6 [shape = 's32[1]{0}', space=sflag, size = 0x4, scoped, tag = 'scoped memory for tpu_custom_call.1']
    #allocation7 [shape = 'u8[4096]{0}', space=vmem, size = 0x1000, scoped, tag = 'output window, operand 0, single buffered']
    %14 = vsyncpa [#allocation3], 0
    %15 = vsyncpa [#allocation6], 0
    %16 = vsyncpa [#allocation4], 0
    // Predicated region
    $region2: #{tpu_custom_call.1} parent=1 // pred_check
      _
    $region3: #{tpu_custom_call.1} parent=1 // pred_check_branch
      %18 = sbr.rel (0) target = $region5
    $region4: #{tpu_custom_call.1} parent=1 // pred_region
      _
    $region5: #{tpu_custom_call.1} parent=1 // pred_fallthru
      _
    // Predicated region
    $region6: #{tpu_custom_call.1} parent=1 // pred_check
      _
    $region7: #{tpu_custom_call.1} parent=1 // pred_check_branch
      %20 = sbr.rel (0) target = $region9
    $region8: #{tpu_custom_call.1} parent=1 // pred_region
      %s22 = ssub.s32 20480, 20480
      %23 = vsyncadd [#allocation3], %s22
      %s24 = sshll.u32 [#allocation2], 4
      %s25 = int_to_ptr.vmem [resolvable:$true] %s24
      %30 = dma.hbm_to_vmem [thread:$0]  %s1, 20480, %s25, [#allocation3], 256, 256, 16
    $region9: #{tpu_custom_call.1} parent=1 // pred_fallthru
      _
    // Predicated region
    $region10: #{tpu_custom_call.1} parent=1 // pred_check
      _
    $region11: #{tpu_custom_call.1} parent=1 // pred_check_branch
      %32 = sbr.rel (0) target = $region13
    $region12: #{tpu_custom_call.1} parent=1 // pred_region
      _
    $region13: #{tpu_custom_call.1} parent=1 // pred_fallthru
      _
    // Predicated region
    $region14: #{tpu_custom_call.1} parent=1 // pred_check
      _
    $region15: #{tpu_custom_call.1} parent=1 // pred_check_branch
      %34 = sbr.rel (0) target = $region17
    $region16: #{tpu_custom_call.1} parent=1 // pred_region
      %s36 = ssub.s32 4096, 4096
      %37 = vsyncadd [#allocation6], %s36
      %s38 = sshll.u32 [#allocation5], 4
      %s39 = int_to_ptr.vmem [resolvable:$true] %s38
      %44 = dma.hbm_to_vmem [thread:$0]  %s3, 4096, %s39, [#allocation6], 64, 64, 4
    $region17: #{tpu_custom_call.1} parent=1 // pred_fallthru
      _
    // Predicated region
    $region18: #{tpu_custom_call.1} parent=1 // pred_check
      _
    $region19: #{tpu_custom_call.1} parent=1 // pred_check_branch
      %46 = sbr.rel (0) target = $region21
    $region20: #{tpu_custom_call.1} parent=1 // pred_region
      _
    $region21: #{tpu_custom_call.1} parent=1 // pred_fallthru
      _
    // Predicated region
    $region22: #{tpu_custom_call.1} parent=1 // pred_check
      _
    $region23: #{tpu_custom_call.1} parent=1 // pred_check_branch
      %48 = sbr.rel (0) target = $region25
    $region24: #{tpu_custom_call.1} parent=1 // pred_region
      _
    $region25: #{tpu_custom_call.1} parent=1 // pred_fallthru
      _
    // Predicated region
    $region26: #{tpu_custom_call.1} parent=1 // pred_check
      _
    $region27: #{tpu_custom_call.1} parent=1 // pred_check_branch
      %50 = sbr.rel (0) target = $region29
    $region28: #{tpu_custom_call.1} parent=1 // pred_region
      _
    $region29: #{tpu_custom_call.1} parent=1 // pred_fallthru
      _
    // Predicated region
    $region30: #{tpu_custom_call.1} parent=1 // pred_check
      _
    $region31: #{tpu_custom_call.1} parent=1 // pred_check_branch
      %52 = sbr.rel (0) target = $region33
    $region32: #{tpu_custom_call.1} parent=1 // pred_region
      _
    $region33: #{tpu_custom_call.1} parent=1 // pred_fallthru
      _
    // Predicated region
    $region34: #{tpu_custom_call.1} parent=1 // pred_check
      _
    $region35: #{tpu_custom_call.1} parent=1 // pred_check_branch
      %54 = sbr.rel (0) target = $region37
    $region36: #{tpu_custom_call.1} parent=1 // pred_region
      _
    $region37: #{tpu_custom_call.1} parent=1 // pred_fallthru
      _
    // Predicated region
    $region38: #{tpu_custom_call.1} parent=1 // pred_check
      _
    $region39: #{tpu_custom_call.1} parent=1 // pred_check_branch
      %56 = sbr.rel (0) target = $region41
    $region40: #{tpu_custom_call.1} parent=1 // pred_region
      %57 = dma.done [#allocation3], 20480
    $region41: #{tpu_custom_call.1} parent=1 // pred_fallthru
      _
    // Predicated region
    $region42: #{tpu_custom_call.1} parent=1 // pred_check
      _
    $region43: #{tpu_custom_call.1} parent=1 // pred_check_branch
      %59 = sbr.rel (0) target = $region45
    $region44: #{tpu_custom_call.1} parent=1 // pred_region
      %60 = dma.done [#allocation6], 4096
    $region45: #{tpu_custom_call.1} parent=1 // pred_fallthru
      _
    %v62 = vld [vmem:[%s0] sm:$0xff]
    %v63 = vld [vmem:[%s0 + $0x8] sm:$0xff]
    %v64 = vld [vmem:[%s0 + $0x10] sm:$0xf]
    %v65 = vld [vmem:[#allocation2] sm:$0xff]
    %v66 = vld [vmem:[#allocation2 + $0x8] sm:$0xff]
    %v67 = vld [vmem:[#allocation2 + $0x10] sm:$0xff]
    %v68 = vld [vmem:[#allocation2 + $0x18] sm:$0xff]
    %v69 = vld [vmem:[#allocation2 + $0x20] sm:$0xff]
    %v70 = vld [vmem:[#allocation2 + $0x28] sm:$0xff]
    %v71 = vld [vmem:[#allocation2 + $0x30] sm:$0xff]
    %v72 = vld [vmem:[#allocation2 + $0x38] sm:$0xff]
    %v73 = vld [vmem:[#allocation2 + $0x40] sm:$0xff]
    %v74 = vld [vmem:[#allocation2 + $0x48] sm:$0xff]
    %v75 = vld [vmem:[#allocation2 + $0x50] sm:$0xff]
    %v76 = vld [vmem:[#allocation2 + $0x58] sm:$0xff]
    %v77 = vld [vmem:[#allocation2 + $0x60] sm:$0xff]
    %v78 = vld [vmem:[#allocation2 + $0x68] sm:$0xff]
    %v79 = vld [vmem:[#allocation2 + $0x70] sm:$0xff]
    %v80 = vld [vmem:[#allocation2 + $0x78] sm:$0xff]
    %v81 = vld [vmem:[#allocation2 + $0x80] sm:$0xff]
    %v82 = vld [vmem:[#allocation2 + $0x88] sm:$0xff]
    %v83 = vld [vmem:[#allocation2 + $0x90] sm:$0xff]
    %v84 = vld [vmem:[#allocation2 + $0x98] sm:$0xff]
    %v85 = vld [vmem:[#allocation2 + $0xa0] sm:$0xff]
    %v86 = vld [vmem:[#allocation2 + $0xa8] sm:$0xff]
    %v87 = vld [vmem:[#allocation2 + $0xb0] sm:$0xff]
    %v88 = vld [vmem:[#allocation2 + $0xb8] sm:$0xff]
    %v89 = vld [vmem:[#allocation2 + $0xc0] sm:$0xff]
    %v90 = vld [vmem:[#allocation2 + $0xc8] sm:$0xff]
    %v91 = vld [vmem:[#allocation2 + $0xd0] sm:$0xff]
    %v92 = vld [vmem:[#allocation2 + $0xd8] sm:$0xff]
    %v93 = vld [vmem:[#allocation2 + $0xe0] sm:$0xff]
    %v94 = vld [vmem:[#allocation2 + $0xe8] sm:$0xff]
    %v95 = vld [vmem:[#allocation2 + $0xf0] sm:$0xff]
    %v96 = vld [vmem:[#allocation2 + $0xf8] sm:$0xff]
    %v97 = vld [vmem:[#allocation2 + $0x100] sm:$0xff]
    %v98 = vld [vmem:[#allocation2 + $0x108] sm:$0xff]
    %v99 = vld [vmem:[#allocation2 + $0x110] sm:$0xff]
    %v100 = vld [vmem:[#allocation2 + $0x118] sm:$0xff]
    %v101 = vld [vmem:[#allocation2 + $0x120] sm:$0xff]
    %v102 = vld [vmem:[#allocation2 + $0x128] sm:$0xff]
    %v103 = vld [vmem:[#allocation2 + $0x130] sm:$0xff]
    %v104 = vld [vmem:[#allocation2 + $0x138] sm:$0xff]
    %v105 = vld [vmem:[#allocation2 + $0x140] sm:$0xff]
    %v106 = vld [vmem:[#allocation2 + $0x148] sm:$0xff]
    %v107 = vld [vmem:[#allocation2 + $0x150] sm:$0xff]
    %v108 = vld [vmem:[#allocation2 + $0x158] sm:$0xff]
    %v109 = vld [vmem:[#allocation2 + $0x160] sm:$0xff]
    %v110 = vld [vmem:[#allocation2 + $0x168] sm:$0xff]
    %v111 = vld [vmem:[#allocation2 + $0x170] sm:$0xff]
    %v112 = vld [vmem:[#allocation2 + $0x178] sm:$0xff]
    %v113 = vld [vmem:[#allocation2 + $0x180] sm:$0xff]
    %v114 = vld [vmem:[#allocation2 + $0x188] sm:$0xff]
    %v115 = vld [vmem:[#allocation2 + $0x190] sm:$0xff]
    %v116 = vld [vmem:[#allocation2 + $0x198] sm:$0xff]
    %v117 = vld [vmem:[#allocation2 + $0x1a0] sm:$0xff]
    %v118 = vld [vmem:[#allocation2 + $0x1a8] sm:$0xff]
    %v119 = vld [vmem:[#allocation2 + $0x1b0] sm:$0xff]
    %v120 = vld [vmem:[#allocation2 + $0x1b8] sm:$0xff]
    %v121 = vld [vmem:[#allocation2 + $0x1c0] sm:$0xff]
    %v122 = vld [vmem:[#allocation2 + $0x1c8] sm:$0xff]
    %v123 = vld [vmem:[#allocation2 + $0x1d0] sm:$0xff]
    %v124 = vld [vmem:[#allocation2 + $0x1d8] sm:$0xff]
    %v125 = vld [vmem:[#allocation2 + $0x1e0] sm:$0xff]
    %v126 = vld [vmem:[#allocation2 + $0x1e8] sm:$0xff]
    %v127 = vld [vmem:[#allocation2 + $0x1f0] sm:$0xff]
    %v128 = vld [vmem:[#allocation2 + $0x1f8] sm:$0xff]
    %v129 = vld [vmem:[#allocation2 + $0x200] sm:$0xff]
    %v130 = vld [vmem:[#allocation2 + $0x208] sm:$0xff]
    %v131 = vld [vmem:[#allocation2 + $0x210] sm:$0xff]
    %v132 = vld [vmem:[#allocation2 + $0x218] sm:$0xff]
    %v133 = vld [vmem:[#allocation2 + $0x220] sm:$0xff]
    %v134 = vld [vmem:[#allocation2 + $0x228] sm:$0xff]
    %v135 = vld [vmem:[#allocation2 + $0x230] sm:$0xff]
    %v136 = vld [vmem:[#allocation2 + $0x238] sm:$0xff]
    %v137 = vld [vmem:[#allocation2 + $0x240] sm:$0xff]
    %v138 = vld [vmem:[#allocation2 + $0x248] sm:$0xff]
    %v139 = vld [vmem:[#allocation2 + $0x250] sm:$0xff]
    %v140 = vld [vmem:[#allocation2 + $0x258] sm:$0xff]
    %v141 = vld [vmem:[#allocation2 + $0x260] sm:$0xff]
    %v142 = vld [vmem:[#allocation2 + $0x268] sm:$0xff]
    %v143 = vld [vmem:[#allocation2 + $0x270] sm:$0xff]
    %v144 = vld [vmem:[#allocation2 + $0x278] sm:$0xff]
    %v145 = vld [vmem:[#allocation2 + $0x280] sm:$0xff]
    %v146 = vld [vmem:[#allocation2 + $0x288] sm:$0xff]
    %v147 = vld [vmem:[#allocation2 + $0x290] sm:$0xff]
    %v148 = vld [vmem:[#allocation2 + $0x298] sm:$0xff]
    %v149 = vld [vmem:[#allocation2 + $0x2a0] sm:$0xff]
    %v150 = vld [vmem:[#allocation2 + $0x2a8] sm:$0xff]
    %v151 = vld [vmem:[#allocation2 + $0x2b0] sm:$0xff]
    %v152 = vld [vmem:[#allocation2 + $0x2b8] sm:$0xff]
    %v153 = vld [vmem:[#allocation2 + $0x2c0] sm:$0xff]
    %v154 = vld [vmem:[#allocation2 + $0x2c8] sm:$0xff]
    %v155 = vld [vmem:[#allocation2 + $0x2d0] sm:$0xff]
    %v156 = vld [vmem:[#allocation2 + $0x2d8] sm:$0xff]
    %v157 = vld [vmem:[#allocation2 + $0x2e0] sm:$0xff]
    %v158 = vld [vmem:[#allocation2 + $0x2e8] sm:$0xff]
    %v159 = vld [vmem:[#allocation2 + $0x2f0] sm:$0xff]
    %v160 = vld [vmem:[#allocation2 + $0x2f8] sm:$0xff]
    %v161 = vld [vmem:[#allocation2 + $0x300] sm:$0xff]
    %v162 = vld [vmem:[#allocation2 + $0x308] sm:$0xff]
    %v163 = vld [vmem:[#allocation2 + $0x310] sm:$0xff]
    %v164 = vld [vmem:[#allocation2 + $0x318] sm:$0xff]
    %v165 = vld [vmem:[#allocation2 + $0x320] sm:$0xff]
    %v166 = vld [vmem:[#allocation2 + $0x328] sm:$0xff]
    %v167 = vld [vmem:[#allocation2 + $0x330] sm:$0xff]
    %v168 = vld [vmem:[#allocation2 + $0x338] sm:$0xff]
    %v169 = vld [vmem:[#allocation2 + $0x340] sm:$0xff]
    %v170 = vld [vmem:[#allocation2 + $0x348] sm:$0xff]
    %v171 = vld [vmem:[#allocation2 + $0x350] sm:$0xff]
    %v172 = vld [vmem:[#allocation2 + $0x358] sm:$0xff]
    %v173 = vld [vmem:[#allocation2 + $0x360] sm:$0xff]
    %v174 = vld [vmem:[#allocation2 + $0x368] sm:$0xff]
    %v175 = vld [vmem:[#allocation2 + $0x370] sm:$0xff]
    %v176 = vld [vmem:[#allocation2 + $0x378] sm:$0xff]
    %v177 = vld [vmem:[#allocation2 + $0x380] sm:$0xff]
    %v178 = vld [vmem:[#allocation2 + $0x388] sm:$0xff]
    %v179 = vld [vmem:[#allocation2 + $0x390] sm:$0xff]
    %v180 = vld [vmem:[#allocation2 + $0x398] sm:$0xff]
    %v181 = vld [vmem:[#allocation2 + $0x3a0] sm:$0xff]
    %v182 = vld [vmem:[#allocation2 + $0x3a8] sm:$0xff]
    %v183 = vld [vmem:[#allocation2 + $0x3b0] sm:$0xff]
    %v184 = vld [vmem:[#allocation2 + $0x3b8] sm:$0xff]
    %v185 = vld [vmem:[#allocation2 + $0x3c0] sm:$0xff]
    %v186 = vld [vmem:[#allocation2 + $0x3c8] sm:$0xff]
    %v187 = vld [vmem:[#allocation2 + $0x3d0] sm:$0xff]
    %v188 = vld [vmem:[#allocation2 + $0x3d8] sm:$0xff]
    %v189 = vld [vmem:[#allocation2 + $0x3e0] sm:$0xff]
    %v190 = vld [vmem:[#allocation2 + $0x3e8] sm:$0xff]
    %v191 = vld [vmem:[#allocation2 + $0x3f0] sm:$0xff]
    %v192 = vld [vmem:[#allocation2 + $0x3f8] sm:$0xff]
    %v193 = vld [vmem:[#allocation2 + $0x400] sm:$0xff]
    %v194 = vld [vmem:[#allocation2 + $0x408] sm:$0xff]
    %v195 = vld [vmem:[#allocation2 + $0x410] sm:$0xff]
    %v196 = vld [vmem:[#allocation2 + $0x418] sm:$0xff]
    %v197 = vld [vmem:[#allocation2 + $0x420] sm:$0xff]
    %v198 = vld [vmem:[#allocation2 + $0x428] sm:$0xff]
    %v199 = vld [vmem:[#allocation2 + $0x430] sm:$0xff]
    %v200 = vld [vmem:[#allocation2 + $0x438] sm:$0xff]
    %v201 = vld [vmem:[#allocation2 + $0x440] sm:$0xff]
    %v202 = vld [vmem:[#allocation2 + $0x448] sm:$0xff]
    %v203 = vld [vmem:[#allocation2 + $0x450] sm:$0xff]
    %v204 = vld [vmem:[#allocation2 + $0x458] sm:$0xff]
    %v205 = vld [vmem:[#allocation2 + $0x460] sm:$0xff]
    %v206 = vld [vmem:[#allocation2 + $0x468] sm:$0xff]
    %v207 = vld [vmem:[#allocation2 + $0x470] sm:$0xff]
    %v208 = vld [vmem:[#allocation2 + $0x478] sm:$0xff]
    %v209 = vld [vmem:[#allocation2 + $0x480] sm:$0xff]
    %v210 = vld [vmem:[#allocation2 + $0x488] sm:$0xff]
    %v211 = vld [vmem:[#allocation2 + $0x490] sm:$0xff]
    %v212 = vld [vmem:[#allocation2 + $0x498] sm:$0xff]
    %v213 = vld [vmem:[#allocation2 + $0x4a0] sm:$0xff]
    %v214 = vld [vmem:[#allocation2 + $0x4a8] sm:$0xff]
    %v215 = vld [vmem:[#allocation2 + $0x4b0] sm:$0xff]
    %v216 = vld [vmem:[#allocation2 + $0x4b8] sm:$0xff]
    %v217 = vld [vmem:[#allocation2 + $0x4c0] sm:$0xff]
    %v218 = vld [vmem:[#allocation2 + $0x4c8] sm:$0xff]
    %v219 = vld [vmem:[#allocation2 + $0x4d0] sm:$0xff]
    %v220 = vld [vmem:[#allocation2 + $0x4d8] sm:$0xff]
    %v221 = vld [vmem:[#allocation2 + $0x4e0] sm:$0xff]
    %v222 = vld [vmem:[#allocation2 + $0x4e8] sm:$0xff]
    %v223 = vld [vmem:[#allocation2 + $0x4f0] sm:$0xff]
    %v224 = vld [vmem:[#allocation2 + $0x4f8] sm:$0xff]
    %v225 = vld [vmem:[%s2] sm:$0xf]
    %v227 = vlaneseq
    %v228 = vshrl.u32 %v227, 7
    %v229 = vsub.s32 0, %v228
    %v230 = vrot.slane %v225, %v229
    %v231 = vlaneseq
    %v232 = vshrl.u32 %v231, 7
    %v233 = vsub.s32 1, %v232
    %v234 = vrot.slane %v225, %v233
    %v235 = vlaneseq
    %v236 = vshrl.u32 %v235, 7
    %v237 = vsub.s32 2, %v236
    %v238 = vrot.slane %v225, %v237
    %v239 = vlaneseq
    %v240 = vshrl.u32 %v239, 7
    %v241 = vsub.s32 3, %v240
    %v242 = vrot.slane %v225, %v241
    %v250 = vunpack.c.l.b16 %v62
    %v251 = vunpack.c.h.b16 %v62
    %v252 = vunpack.c.l.b16 %v63
    %v253 = vunpack.c.h.b16 %v63
    %v254 = vunpack.c.l.b16 %v64
    %v255 = vpack.c.b16 %v250, %v250
    %v256 = vpack.c.b16 %v251, %v251
    %v257 = vpack.c.b16 %v252, %v252
    %v258 = vpack.c.b16 %v253, %v253
    %v259 = vpack.c.b16 %v254, %v254
    %v425 = vunpack.c.l.b16 %v65
    %v426 = vunpack.c.h.b16 %v65
    %v427 = vunpack.c.l.b16 %v66
    %v428 = vunpack.c.h.b16 %v66
    %v429 = vunpack.c.l.b16 %v67
    %v430 = vunpack.c.h.b16 %v67
    %v431 = vunpack.c.l.b16 %v68
    %v432 = vunpack.c.h.b16 %v68
    %v433 = vunpack.c.l.b16 %v69
    %v434 = vunpack.c.h.b16 %v69
    %v435 = vunpack.c.l.b16 %v70
    %v436 = vunpack.c.h.b16 %v70
    %v437 = vunpack.c.l.b16 %v71
    %v438 = vunpack.c.h.b16 %v71
    %v439 = vunpack.c.l.b16 %v72
    %v440 = vunpack.c.h.b16 %v72
    %v441 = vunpack.c.l.b16 %v73
    %v442 = vunpack.c.h.b16 %v73
    %v443 = vunpack.c.l.b16 %v74
    %v444 = vunpack.c.h.b16 %v74
    %v445 = vunpack.c.l.b16 %v75
    %v446 = vunpack.c.h.b16 %v75
    %v447 = vunpack.c.l.b16 %v76
    %v448 = vunpack.c.h.b16 %v76
    %v449 = vunpack.c.l.b16 %v77
    %v450 = vunpack.c.h.b16 %v77
    %v451 = vunpack.c.l.b16 %v78
    %v452 = vunpack.c.h.b16 %v78
    %v453 = vunpack.c.l.b16 %v79
    %v454 = vunpack.c.h.b16 %v79
    %v455 = vunpack.c.l.b16 %v80
    %v456 = vunpack.c.h.b16 %v80
    %v457 = vunpack.c.l.b16 %v81
    %v458 = vunpack.c.h.b16 %v81
    %v459 = vunpack.c.l.b16 %v82
    %v460 = vunpack.c.h.b16 %v82
    %v461 = vunpack.c.l.b16 %v83
    %v462 = vunpack.c.h.b16 %v83
    %v463 = vunpack.c.l.b16 %v84
    %v464 = vunpack.c.h.b16 %v84
    %v465 = vunpack.c.l.b16 %v85
    %v466 = vunpack.c.h.b16 %v85
    %v467 = vunpack.c.l.b16 %v86
    %v468 = vunpack.c.h.b16 %v86
    %v469 = vunpack.c.l.b16 %v87
    %v470 = vunpack.c.h.b16 %v87
    %v471 = vunpack.c.l.b16 %v88
    %v472 = vunpack.c.h.b16 %v88
    %v473 = vunpack.c.l.b16 %v89
    %v474 = vunpack.c.h.b16 %v89
    %v475 = vunpack.c.l.b16 %v90
    %v476 = vunpack.c.h.b16 %v90
    %v477 = vunpack.c.l.b16 %v91
    %v478 = vunpack.c.h.b16 %v91
    %v479 = vunpack.c.l.b16 %v92
    %v480 = vunpack.c.h.b16 %v92
    %v481 = vunpack.c.l.b16 %v93
    %v482 = vunpack.c.h.b16 %v93
    %v483 = vunpack.c.l.b16 %v94
    %v484 = vunpack.c.h.b16 %v94
    %v485 = vunpack.c.l.b16 %v95
    %v486 = vunpack.c.h.b16 %v95
    %v487 = vunpack.c.l.b16 %v96
    %v488 = vunpack.c.h.b16 %v96
    %v489 = vunpack.c.l.b16 %v97
    %v490 = vunpack.c.h.b16 %v97
    %v491 = vunpack.c.l.b16 %v98
    %v492 = vunpack.c.h.b16 %v98
    %v493 = vunpack.c.l.b16 %v99
    %v494 = vunpack.c.h.b16 %v99
    %v495 = vunpack.c.l.b16 %v100
    %v496 = vunpack.c.h.b16 %v100
    %v497 = vunpack.c.l.b16 %v101
    %v498 = vunpack.c.h.b16 %v101
    %v499 = vunpack.c.l.b16 %v102
    %v500 = vunpack.c.h.b16 %v102
    %v501 = vunpack.c.l.b16 %v103
    %v502 = vunpack.c.h.b16 %v103
    %v503 = vunpack.c.l.b16 %v104
    %v504 = vunpack.c.h.b16 %v104
    %v505 = vunpack.c.l.b16 %v105
    %v506 = vunpack.c.h.b16 %v105
    %v507 = vunpack.c.l.b16 %v106
    %v508 = vunpack.c.h.b16 %v106
    %v509 = vunpack.c.l.b16 %v107
    %v510 = vunpack.c.h.b16 %v107
    %v511 = vunpack.c.l.b16 %v108
    %v512 = vunpack.c.h.b16 %v108
    %v513 = vunpack.c.l.b16 %v109
    %v514 = vunpack.c.h.b16 %v109
    %v515 = vunpack.c.l.b16 %v110
    %v516 = vunpack.c.h.b16 %v110
    %v517 = vunpack.c.l.b16 %v111
    %v518 = vunpack.c.h.b16 %v111
    %v519 = vunpack.c.l.b16 %v112
    %v520 = vunpack.c.h.b16 %v112
    %v521 = vunpack.c.l.b16 %v113
    %v522 = vunpack.c.h.b16 %v113
    %v523 = vunpack.c.l.b16 %v114
    %v524 = vunpack.c.h.b16 %v114
    %v525 = vunpack.c.l.b16 %v115
    %v526 = vunpack.c.h.b16 %v115
    %v527 = vunpack.c.l.b16 %v116
    %v528 = vunpack.c.h.b16 %v116
    %v529 = vunpack.c.l.b16 %v117
    %v530 = vunpack.c.h.b16 %v117
    %v531 = vunpack.c.l.b16 %v118
    %v532 = vunpack.c.h.b16 %v118
    %v533 = vunpack.c.l.b16 %v119
    %v534 = vunpack.c.h.b16 %v119
    %v535 = vunpack.c.l.b16 %v120
    %v536 = vunpack.c.h.b16 %v120
    %v537 = vunpack.c.l.b16 %v121
    %v538 = vunpack.c.h.b16 %v121
    %v539 = vunpack.c.l.b16 %v122
    %v540 = vunpack.c.h.b16 %v122
    %v541 = vunpack.c.l.b16 %v123
    %v542 = vunpack.c.h.b16 %v123
    %v543 = vunpack.c.l.b16 %v124
    %v544 = vunpack.c.h.b16 %v124
    %v545 = vunpack.c.l.b16 %v125
    %v546 = vunpack.c.h.b16 %v125
    %v547 = vunpack.c.l.b16 %v126
    %v548 = vunpack.c.h.b16 %v126
    %v549 = vunpack.c.l.b16 %v127
    %v550 = vunpack.c.h.b16 %v127
    %v551 = vunpack.c.l.b16 %v128
    %v552 = vunpack.c.h.b16 %v128
    %v553 = vunpack.c.l.b16 %v129
    %v554 = vunpack.c.h.b16 %v129
    %v555 = vunpack.c.l.b16 %v130
    %v556 = vunpack.c.h.b16 %v130
    %v557 = vunpack.c.l.b16 %v131
    %v558 = vunpack.c.h.b16 %v131
    %v559 = vunpack.c.l.b16 %v132
    %v560 = vunpack.c.h.b16 %v132
    %v561 = vunpack.c.l.b16 %v133
    %v562 = vunpack.c.h.b16 %v133
    %v563 = vunpack.c.l.b16 %v134
    %v564 = vunpack.c.h.b16 %v134
    %v565 = vunpack.c.l.b16 %v135
    %v566 = vunpack.c.h.b16 %v135
    %v567 = vunpack.c.l.b16 %v136
    %v568 = vunpack.c.h.b16 %v136
    %v569 = vunpack.c.l.b16 %v137
    %v570 = vunpack.c.h.b16 %v137
    %v571 = vunpack.c.l.b16 %v138
    %v572 = vunpack.c.h.b16 %v138
    %v573 = vunpack.c.l.b16 %v139
    %v574 = vunpack.c.h.b16 %v139
    %v575 = vunpack.c.l.b16 %v140
    %v576 = vunpack.c.h.b16 %v140
    %v577 = vunpack.c.l.b16 %v141
    %v578 = vunpack.c.h.b16 %v141
    %v579 = vunpack.c.l.b16 %v142
    %v580 = vunpack.c.h.b16 %v142
    %v581 = vunpack.c.l.b16 %v143
    %v582 = vunpack.c.h.b16 %v143
    %v583 = vunpack.c.l.b16 %v144
    %v584 = vunpack.c.h.b16 %v144
    %v585 = vunpack.c.l.b16 %v145
    %v586 = vunpack.c.h.b16 %v145
    %v587 = vunpack.c.l.b16 %v146
    %v588 = vunpack.c.h.b16 %v146
    %v589 = vunpack.c.l.b16 %v147
    %v590 = vunpack.c.h.b16 %v147
    %v591 = vunpack.c.l.b16 %v148
    %v592 = vunpack.c.h.b16 %v148
    %v593 = vunpack.c.l.b16 %v149
    %v594 = vunpack.c.h.b16 %v149
    %v595 = vunpack.c.l.b16 %v150
    %v596 = vunpack.c.h.b16 %v150
    %v597 = vunpack.c.l.b16 %v151
    %v598 = vunpack.c.h.b16 %v151
    %v599 = vunpack.c.l.b16 %v152
    %v600 = vunpack.c.h.b16 %v152
    %v601 = vunpack.c.l.b16 %v153
    %v602 = vunpack.c.h.b16 %v153
    %v603 = vunpack.c.l.b16 %v154
    %v604 = vunpack.c.h.b16 %v154
    %v605 = vunpack.c.l.b16 %v155
    %v606 = vunpack.c.h.b16 %v155
    %v607 = vunpack.c.l.b16 %v156
    %v608 = vunpack.c.h.b16 %v156
    %v609 = vunpack.c.l.b16 %v157
    %v610 = vunpack.c.h.b16 %v157
    %v611 = vunpack.c.l.b16 %v158
    %v612 = vunpack.c.h.b16 %v158
    %v613 = vunpack.c.l.b16 %v159
    %v614 = vunpack.c.h.b16 %v159
    %v615 = vunpack.c.l.b16 %v160
    %v616 = vunpack.c.h.b16 %v160
    %v617 = vunpack.c.l.b16 %v161
    %v618 = vunpack.c.h.b16 %v161
    %v619 = vunpack.c.l.b16 %v162
    %v620 = vunpack.c.h.b16 %v162
    %v621 = vunpack.c.l.b16 %v163
    %v622 = vunpack.c.h.b16 %v163
    %v623 = vunpack.c.l.b16 %v164
    %v624 = vunpack.c.h.b16 %v164
    %v625 = vunpack.c.l.b16 %v165
    %v626 = vunpack.c.h.b16 %v165
    %v627 = vunpack.c.l.b16 %v166
    %v628 = vunpack.c.h.b16 %v166
    %v629 = vunpack.c.l.b16 %v167
    %v630 = vunpack.c.h.b16 %v167
    %v631 = vunpack.c.l.b16 %v168
    %v632 = vunpack.c.h.b16 %v168
    %v633 = vunpack.c.l.b16 %v169
    %v634 = vunpack.c.h.b16 %v169
    %v635 = vunpack.c.l.b16 %v170
    %v636 = vunpack.c.h.b16 %v170
    %v637 = vunpack.c.l.b16 %v171
    %v638 = vunpack.c.h.b16 %v171
    %v639 = vunpack.c.l.b16 %v172
    %v640 = vunpack.c.h.b16 %v172
    %v641 = vunpack.c.l.b16 %v173
    %v642 = vunpack.c.h.b16 %v173
    %v643 = vunpack.c.l.b16 %v174
    %v644 = vunpack.c.h.b16 %v174
    %v645 = vunpack.c.l.b16 %v175
    %v646 = vunpack.c.h.b16 %v175
    %v647 = vunpack.c.l.b16 %v176
    %v648 = vunpack.c.h.b16 %v176
    %v649 = vunpack.c.l.b16 %v177
    %v650 = vunpack.c.h.b16 %v177
    %v651 = vunpack.c.l.b16 %v178
    %v652 = vunpack.c.h.b16 %v178
    %v653 = vunpack.c.l.b16 %v179
    %v654 = vunpack.c.h.b16 %v179
    %v655 = vunpack.c.l.b16 %v180
    %v656 = vunpack.c.h.b16 %v180
    %v657 = vunpack.c.l.b16 %v181
    %v658 = vunpack.c.h.b16 %v181
    %v659 = vunpack.c.l.b16 %v182
    %v660 = vunpack.c.h.b16 %v182
    %v661 = vunpack.c.l.b16 %v183
    %v662 = vunpack.c.h.b16 %v183
    %v663 = vunpack.c.l.b16 %v184
    %v664 = vunpack.c.h.b16 %v184
    %v665 = vunpack.c.l.b16 %v185
    %v666 = vunpack.c.h.b16 %v185
    %v667 = vunpack.c.l.b16 %v186
    %v668 = vunpack.c.h.b16 %v186
    %v669 = vunpack.c.l.b16 %v187
    %v670 = vunpack.c.h.b16 %v187
    %v671 = vunpack.c.l.b16 %v188
    %v672 = vunpack.c.h.b16 %v188
    %v673 = vunpack.c.l.b16 %v189
    %v674 = vunpack.c.h.b16 %v189
    %v675 = vunpack.c.l.b16 %v190
    %v676 = vunpack.c.h.b16 %v190
    %v677 = vunpack.c.l.b16 %v191
    %v678 = vunpack.c.h.b16 %v191
    %v679 = vunpack.c.l.b16 %v192
    %v680 = vunpack.c.h.b16 %v192
    %v681 = vunpack.c.l.b16 %v193
    %v682 = vunpack.c.h.b16 %v193
    %v683 = vunpack.c.l.b16 %v194
    %v684 = vunpack.c.h.b16 %v194
    %v685 = vunpack.c.l.b16 %v195
    %v686 = vunpack.c.h.b16 %v195
    %v687 = vunpack.c.l.b16 %v196
    %v688 = vunpack.c.h.b16 %v196
    %v689 = vunpack.c.l.b16 %v197
    %v690 = vunpack.c.h.b16 %v197
    %v691 = vunpack.c.l.b16 %v198
    %v692 = vunpack.c.h.b16 %v198
    %v693 = vunpack.c.l.b16 %v199
    %v694 = vunpack.c.h.b16 %v199
    %v695 = vunpack.c.l.b16 %v200
    %v696 = vunpack.c.h.b16 %v200
    %v697 = vunpack.c.l.b16 %v201
    %v698 = vunpack.c.h.b16 %v201
    %v699 = vunpack.c.l.b16 %v202
    %v700 = vunpack.c.h.b16 %v202
    %v701 = vunpack.c.l.b16 %v203
    %v702 = vunpack.c.h.b16 %v203
    %v703 = vunpack.c.l.b16 %v204
    %v704 = vunpack.c.h.b16 %v204
    %v705 = vunpack.c.l.b16 %v205
    %v706 = vunpack.c.h.b16 %v205
    %v707 = vunpack.c.l.b16 %v206
    %v708 = vunpack.c.h.b16 %v206
    %v709 = vunpack.c.l.b16 %v207
    %v710 = vunpack.c.h.b16 %v207
    %v711 = vunpack.c.l.b16 %v208
    %v712 = vunpack.c.h.b16 %v208
    %v713 = vunpack.c.l.b16 %v209
    %v714 = vunpack.c.h.b16 %v209
    %v715 = vunpack.c.l.b16 %v210
    %v716 = vunpack.c.h.b16 %v210
    %v717 = vunpack.c.l.b16 %v211
    %v718 = vunpack.c.h.b16 %v211
    %v719 = vunpack.c.l.b16 %v212
    %v720 = vunpack.c.h.b16 %v212
    %v721 = vunpack.c.l.b16 %v213
    %v722 = vunpack.c.h.b16 %v213
    %v723 = vunpack.c.l.b16 %v214
    %v724 = vunpack.c.h.b16 %v214
    %v725 = vunpack.c.l.b16 %v215
    %v726 = vunpack.c.h.b16 %v215
    %v727 = vunpack.c.l.b16 %v216
    %v728 = vunpack.c.h.b16 %v216
    %v729 = vunpack.c.l.b16 %v217
    %v730 = vunpack.c.h.b16 %v217
    %v731 = vunpack.c.l.b16 %v218
    %v732 = vunpack.c.h.b16 %v218
    %v733 = vunpack.c.l.b16 %v219
    %v734 = vunpack.c.h.b16 %v219
    %v735 = vunpack.c.l.b16 %v220
    %v736 = vunpack.c.h.b16 %v220
    %v737 = vunpack.c.l.b16 %v221
    %v738 = vunpack.c.h.b16 %v221
    %v739 = vunpack.c.l.b16 %v222
    %v740 = vunpack.c.h.b16 %v222
    %v741 = vunpack.c.l.b16 %v223
    %v742 = vunpack.c.h.b16 %v223
    %v743 = vunpack.c.l.b16 %v224
    %v744 = vunpack.c.h.b16 %v224
    %v745 = vpack.c.b16 %v429, %v425
    %v746 = vpack.c.b16 %v430, %v426
    %v747 = vpack.c.b16 %v431, %v427
    %v748 = vpack.c.b16 %v432, %v428
    %v749 = vpack.c.b16 %v437, %v433
    %v750 = vpack.c.b16 %v438, %v434
    %v751 = vpack.c.b16 %v439, %v435
    %v752 = vpack.c.b16 %v440, %v436
    %v753 = vpack.c.b16 %v445, %v441
    %v754 = vpack.c.b16 %v446, %v442
    %v755 = vpack.c.b16 %v447, %v443
    %v756 = vpack.c.b16 %v448, %v444
    %v757 = vpack.c.b16 %v453, %v449
    %v758 = vpack.c.b16 %v454, %v450
    %v759 = vpack.c.b16 %v455, %v451
    %v760 = vpack.c.b16 %v456, %v452
    %v761 = vpack.c.b16 %v461, %v457
    %v762 = vpack.c.b16 %v462, %v458
    %v763 = vpack.c.b16 %v463, %v459
    %v764 = vpack.c.b16 %v464, %v460
    %v765 = vpack.c.b16 %v469, %v465
    %v766 = vpack.c.b16 %v470, %v466
    %v767 = vpack.c.b16 %v471, %v467
    %v768 = vpack.c.b16 %v472, %v468
    %v769 = vpack.c.b16 %v477, %v473
    %v770 = vpack.c.b16 %v478, %v474
    %v771 = vpack.c.b16 %v479, %v475
    %v772 = vpack.c.b16 %v480, %v476
    %v773 = vpack.c.b16 %v485, %v481
    %v774 = vpack.c.b16 %v486, %v482
    %v775 = vpack.c.b16 %v487, %v483
    %v776 = vpack.c.b16 %v488, %v484
    %v777 = vpack.c.b16 %v493, %v489
    %v778 = vpack.c.b16 %v494, %v490
    %v779 = vpack.c.b16 %v495, %v491
    %v780 = vpack.c.b16 %v496, %v492
    %v781 = vpack.c.b16 %v501, %v497
    %v782 = vpack.c.b16 %v502, %v498
    %v783 = vpack.c.b16 %v503, %v499
    %v784 = vpack.c.b16 %v504, %v500
    %v785 = vpack.c.b16 %v509, %v505
    %v786 = vpack.c.b16 %v510, %v506
    %v787 = vpack.c.b16 %v511, %v507
    %v788 = vpack.c.b16 %v512, %v508
    %v789 = vpack.c.b16 %v517, %v513
    %v790 = vpack.c.b16 %v518, %v514
    %v791 = vpack.c.b16 %v519, %v515
    %v792 = vpack.c.b16 %v520, %v516
    %v793 = vpack.c.b16 %v525, %v521
    %v794 = vpack.c.b16 %v526, %v522
    %v795 = vpack.c.b16 %v527, %v523
    %v796 = vpack.c.b16 %v528, %v524
    %v797 = vpack.c.b16 %v533, %v529
    %v798 = vpack.c.b16 %v534, %v530
    %v799 = vpack.c.b16 %v535, %v531
    %v800 = vpack.c.b16 %v536, %v532
    %v801 = vpack.c.b16 %v541, %v537
    %v802 = vpack.c.b16 %v542, %v538
    %v803 = vpack.c.b16 %v543, %v539
    %v804 = vpack.c.b16 %v544, %v540
    %v805 = vpack.c.b16 %v549, %v545
    %v806 = vpack.c.b16 %v550, %v546
    %v807 = vpack.c.b16 %v551, %v547
    %v808 = vpack.c.b16 %v552, %v548
    %v809 = vpack.c.b16 %v557, %v553
    %v810 = vpack.c.b16 %v558, %v554
    %v811 = vpack.c.b16 %v559, %v555
    %v812 = vpack.c.b16 %v560, %v556
    %v813 = vpack.c.b16 %v565, %v561
    %v814 = vpack.c.b16 %v566, %v562
    %v815 = vpack.c.b16 %v567, %v563
    %v816 = vpack.c.b16 %v568, %v564
    %v817 = vpack.c.b16 %v573, %v569
    %v818 = vpack.c.b16 %v574, %v570
    %v819 = vpack.c.b16 %v575, %v571
    %v820 = vpack.c.b16 %v576, %v572
    %v821 = vpack.c.b16 %v581, %v577
    %v822 = vpack.c.b16 %v582, %v578
    %v823 = vpack.c.b16 %v583, %v579
    %v824 = vpack.c.b16 %v584, %v580
    %v825 = vpack.c.b16 %v589, %v585
    %v826 = vpack.c.b16 %v590, %v586
    %v827 = vpack.c.b16 %v591, %v587
    %v828 = vpack.c.b16 %v592, %v588
    %v829 = vpack.c.b16 %v597, %v593
    %v830 = vpack.c.b16 %v598, %v594
    %v831 = vpack.c.b16 %v599, %v595
    %v832 = vpack.c.b16 %v600, %v596
    %v833 = vpack.c.b16 %v605, %v601
    %v834 = vpack.c.b16 %v606, %v602
    %v835 = vpack.c.b16 %v607, %v603
    %v836 = vpack.c.b16 %v608, %v604
    %v837 = vpack.c.b16 %v613, %v609
    %v838 = vpack.c.b16 %v614, %v610
    %v839 = vpack.c.b16 %v615, %v611
    %v840 = vpack.c.b16 %v616, %v612
    %v841 = vpack.c.b16 %v621, %v617
    %v842 = vpack.c.b16 %v622, %v618
    %v843 = vpack.c.b16 %v623, %v619
    %v844 = vpack.c.b16 %v624, %v620
    %v845 = vpack.c.b16 %v629, %v625
    %v846 = vpack.c.b16 %v630, %v626
    %v847 = vpack.c.b16 %v631, %v627
    %v848 = vpack.c.b16 %v632, %v628
    %v849 = vpack.c.b16 %v637, %v633
    %v850 = vpack.c.b16 %v638, %v634
    %v851 = vpack.c.b16 %v639, %v635
    %v852 = vpack.c.b16 %v640, %v636
    %v853 = vpack.c.b16 %v645, %v641
    %v854 = vpack.c.b16 %v646, %v642
    %v855 = vpack.c.b16 %v647, %v643
    %v856 = vpack.c.b16 %v648, %v644
    %v857 = vpack.c.b16 %v653, %v649
    %v858 = vpack.c.b16 %v654, %v650
    %v859 = vpack.c.b16 %v655, %v651
    %v860 = vpack.c.b16 %v656, %v652
    %v861 = vpack.c.b16 %v661, %v657
    %v862 = vpack.c.b16 %v662, %v658
    %v863 = vpack.c.b16 %v663, %v659
    %v864 = vpack.c.b16 %v664, %v660
    %v865 = vpack.c.b16 %v669, %v665
    %v866 = vpack.c.b16 %v670, %v666
    %v867 = vpack.c.b16 %v671, %v667
    %v868 = vpack.c.b16 %v672, %v668
    %v869 = vpack.c.b16 %v677, %v673
    %v870 = vpack.c.b16 %v678, %v674
    %v871 = vpack.c.b16 %v679, %v675
    %v872 = vpack.c.b16 %v680, %v676
    %v873 = vpack.c.b16 %v685, %v681
    %v874 = vpack.c.b16 %v686, %v682
    %v875 = vpack.c.b16 %v687, %v683
    %v876 = vpack.c.b16 %v688, %v684
    %v877 = vpack.c.b16 %v693, %v689
    %v878 = vpack.c.b16 %v694, %v690
    %v879 = vpack.c.b16 %v695, %v691
    %v880 = vpack.c.b16 %v696, %v692
    %v881 = vpack.c.b16 %v701, %v697
    %v882 = vpack.c.b16 %v702, %v698
    %v883 = vpack.c.b16 %v703, %v699
    %v884 = vpack.c.b16 %v704, %v700
    %v885 = vpack.c.b16 %v709, %v705
    %v886 = vpack.c.b16 %v710, %v706
    %v887 = vpack.c.b16 %v711, %v707
    %v888 = vpack.c.b16 %v712, %v708
    %v889 = vpack.c.b16 %v717, %v713
    %v890 = vpack.c.b16 %v718, %v714
    %v891 = vpack.c.b16 %v719, %v715
    %v892 = vpack.c.b16 %v720, %v716
    %v893 = vpack.c.b16 %v725, %v721
    %v894 = vpack.c.b16 %v726, %v722
    %v895 = vpack.c.b16 %v727, %v723
    %v896 = vpack.c.b16 %v728, %v724
    %v897 = vpack.c.b16 %v733, %v729
    %v898 = vpack.c.b16 %v734, %v730
    %v899 = vpack.c.b16 %v735, %v731
    %v900 = vpack.c.b16 %v736, %v732
    %v901 = vpack.c.b16 %v741, %v737
    %v902 = vpack.c.b16 %v742, %v738
    %v903 = vpack.c.b16 %v743, %v739
    %v904 = vpack.c.b16 %v744, %v740
    %1065 = vmatprep.subr.bf16.mxu0 %v746
    %1066 = vmatpush1.bf16.msra.mxu0 %v745
    %1067 = vmatprep.subr.bf16.mxu0 %v750
    %1068 = vmatpush1.bf16.msra.mxu0 %v749
    %1069 = vmatprep.subr.bf16.mxu0 %v754
    %1070 = vmatpush1.bf16.msra.mxu0 %v753
    %1071 = vmatprep.subr.bf16.mxu0 %v758
    %1072 = vmatpush1.bf16.msra.mxu0 %v757
    %1073 = vmatprep.subr.bf16.mxu0 %v762
    %1074 = vmatpush1.bf16.msra.mxu0 %v761
    %1075 = vmatprep.subr.bf16.mxu0 %v766
    %1076 = vmatpush1.bf16.msra.mxu0 %v765
    %1077 = vmatprep.subr.bf16.mxu0 %v770
    %1078 = vmatpush1.bf16.msra.mxu0 %v769
    %1079 = vmatprep.subr.bf16.mxu0 %v774
    %1080 = vmatpush1.bf16.msra.mxu0 %v773
    %1081 = vmatprep.subr.bf16.mxu0 %v778
    %1082 = vmatpush1.bf16.msra.mxu0 %v777
    %1083 = vmatprep.subr.bf16.mxu0 %v782
    %1084 = vmatpush1.bf16.msra.mxu0 %v781
    %1085 = vmatprep.subr.bf16.mxu0 %v786
    %1086 = vmatpush1.bf16.msra.mxu0 %v785
    %1087 = vmatprep.subr.bf16.mxu0 %v790
    %1088 = vmatpush1.bf16.msra.mxu0 %v789
    %1089 = vmatprep.subr.bf16.mxu0 %v794
    %1090 = vmatpush1.bf16.msra.mxu0 %v793
    %1091 = vmatprep.subr.bf16.mxu0 %v798
    %1092 = vmatpush1.bf16.msra.mxu0 %v797
    %1093 = vmatprep.subr.bf16.mxu0 %v802
    %1094 = vmatpush1.bf16.msra.mxu0 %v801
    %1095 = vmatprep.subr.bf16.mxu0 %v806
    %1096 = vmatpush1.bf16.msra.mxu0 %v805
    %1097 = vmatprep.mubr.bf16.mxu0 %v256
    %1098 = vmatmul.mubr.bf16.gmra.mrb[0].mxu0 %v255
    %v1099 = vpop.f32.mrb[0].mxu0
    %v1100 = vadd.f32 %v230, %v1099
    %v1101 = vpop.f32.mrb[0].mxu0
    %v1102 = vadd.f32 %v234, %v1101
    %v1103 = vpop.f32.mrb[0].mxu0
    %v1104 = vpop.f32.mrb[0].mxu0
    %1105 = vdwg.mxu0
    %1106 = vmatprep.subr.bf16.mxu0 %v810
    %1107 = vmatpush1.bf16.msra.mxu0 %v809
    %1108 = vmatprep.subr.bf16.mxu0 %v814
    %1109 = vmatpush1.bf16.msra.mxu0 %v813
    %1110 = vmatprep.subr.bf16.mxu0 %v818
    %1111 = vmatpush1.bf16.msra.mxu0 %v817
    %1112 = vmatprep.subr.bf16.mxu0 %v822
    %1113 = vmatpush1.bf16.msra.mxu0 %v821
    %1114 = vmatprep.subr.bf16.mxu0 %v826
    %1115 = vmatpush1.bf16.msra.mxu0 %v825
    %1116 = vmatprep.subr.bf16.mxu0 %v830
    %1117 = vmatpush1.bf16.msra.mxu0 %v829
    %1118 = vmatprep.subr.bf16.mxu0 %v834
    %1119 = vmatpush1.bf16.msra.mxu0 %v833
    %1120 = vmatprep.subr.bf16.mxu0 %v838
    %1121 = vmatpush1.bf16.msra.mxu0 %v837
    %1122 = vmatprep.subr.bf16.mxu0 %v842
    %1123 = vmatpush1.bf16.msra.mxu0 %v841
    %1124 = vmatprep.subr.bf16.mxu0 %v846
    %1125 = vmatpush1.bf16.msra.mxu0 %v845
    %1126 = vmatprep.subr.bf16.mxu0 %v850
    %1127 = vmatpush1.bf16.msra.mxu0 %v849
    %1128 = vmatprep.subr.bf16.mxu0 %v854
    %1129 = vmatpush1.bf16.msra.mxu0 %v853
    %1130 = vmatprep.subr.bf16.mxu0 %v858
    %1131 = vmatpush1.bf16.msra.mxu0 %v857
    %1132 = vmatprep.subr.bf16.mxu0 %v862
    %1133 = vmatpush1.bf16.msra.mxu0 %v861
    %1134 = vmatprep.subr.bf16.mxu0 %v866
    %1135 = vmatpush1.bf16.msra.mxu0 %v865
    %1136 = vmatprep.subr.bf16.mxu0 %v870
    %1137 = vmatpush1.bf16.msra.mxu0 %v869
    %1138 = vmatprep.mubr.bf16.mxu0 %v258
    %1139 = vmatmul.mubr.bf16.gmra.mrb[0].mxu0 %v257
    %v1140 = vpop.f32.mrb[0].mxu0
    %v1141 = vadd.f32 %v1100, %v1140
    %v1142 = vpop.f32.mrb[0].mxu0
    %v1143 = vadd.f32 %v1102, %v1142
    %v1144 = vpop.f32.mrb[0].mxu0
    %v1145 = vpop.f32.mrb[0].mxu0
    %1146 = vdwg.mxu0
    %1147 = vmatprep.subr.bf16.mxu0 %v874
    %1148 = vmatpush1.bf16.msra.mxu0 %v873
    %1149 = vmatprep.subr.bf16.mxu0 %v878
    %1150 = vmatpush1.bf16.msra.mxu0 %v877
    %1151 = vmatprep.subr.bf16.mxu0 %v882
    %1152 = vmatpush1.bf16.msra.mxu0 %v881
    %1153 = vmatprep.subr.bf16.mxu0 %v886
    %1154 = vmatpush1.bf16.msra.mxu0 %v885
    %1155 = vmatprep.subr.bf16.mxu0 %v890
    %1156 = vmatpush1.bf16.msra.mxu0 %v889
    %1157 = vmatprep.subr.bf16.mxu0 %v894
    %1158 = vmatpush1.bf16.msra.mxu0 %v893
    %1159 = vmatprep.subr.bf16.mxu0 %v898
    %1160 = vmatpush1.bf16.msra.mxu0 %v897
    %1161 = vmatprep.subr.bf16.mxu0 %v902
    %1162 = vmatpush1.bf16.msra.mxu0 %v901
    %1163 = vmatprep.subr.bf16.mxu0 0
    %1164 = vmatpush1.bf16.msra.mxu0 0
    %1165 = vmatprep.subr.bf16.mxu0 0
    %1166 = vmatpush1.bf16.msra.mxu0 0
    %1167 = vmatprep.subr.bf16.mxu0 0
    %1168 = vmatpush1.bf16.msra.mxu0 0
    %1169 = vmatprep.subr.bf16.mxu0 0
    %1170 = vmatpush1.bf16.msra.mxu0 0
    %1171 = vmatprep.subr.bf16.mxu0 0
    %1172 = vmatpush1.bf16.msra.mxu0 0
    %1173 = vmatprep.subr.bf16.mxu0 0
    %1174 = vmatpush1.bf16.msra.mxu0 0
    %1175 = vmatprep.subr.bf16.mxu0 0
    %1176 = vmatpush1.bf16.msra.mxu0 0
    %1177 = vmatprep.subr.bf16.mxu0 0
    %1178 = vmatpush1.bf16.msra.mxu0 0
    %1179 = vmatprep.mubr.bf16.mxu0 0
    %1180 = vmatmul.mubr.bf16.gmra.mrb[0].mxu0 %v259
    %v1181 = vpop.f32.mrb[0].mxu0
    %v1182 = vadd.f32 %v1141, %v1181
    %v1183 = vpop.f32.mrb[0].mxu0
    %v1184 = vadd.f32 %v1143, %v1183
    %v1185 = vpop.f32.mrb[0].mxu0
    %v1186 = vpop.f32.mrb[0].mxu0
    %1187 = vdwg.mxu0
    %1188 = vmatprep.subr.bf16.mxu0 %v748
    %1189 = vmatpush1.bf16.msra.mxu0 %v747
    %1190 = vmatprep.subr.bf16.mxu0 %v752
    %1191 = vmatpush1.bf16.msra.mxu0 %v751
    %1192 = vmatprep.subr.bf16.mxu0 %v756
    %1193 = vmatpush1.bf16.msra.mxu0 %v755
    %1194 = vmatprep.subr.bf16.mxu0 %v760
    %1195 = vmatpush1.bf16.msra.mxu0 %v759
    %1196 = vmatprep.subr.bf16.mxu0 %v764
    %1197 = vmatpush1.bf16.msra.mxu0 %v763
    %1198 = vmatprep.subr.bf16.mxu0 %v768
    %1199 = vmatpush1.bf16.msra.mxu0 %v767
    %1200 = vmatprep.subr.bf16.mxu0 %v772
    %1201 = vmatpush1.bf16.msra.mxu0 %v771
    %1202 = vmatprep.subr.bf16.mxu0 %v776
    %1203 = vmatpush1.bf16.msra.mxu0 %v775
    %1204 = vmatprep.subr.bf16.mxu0 %v780
    %1205 = vmatpush1.bf16.msra.mxu0 %v779
    %1206 = vmatprep.subr.bf16.mxu0 %v784
    %1207 = vmatpush1.bf16.msra.mxu0 %v783
    %1208 = vmatprep.subr.bf16.mxu0 %v788
    %1209 = vmatpush1.bf16.msra.mxu0 %v787
    %1210 = vmatprep.subr.bf16.mxu0 %v792
    %1211 = vmatpush1.bf16.msra.mxu0 %v791
    %1212 = vmatprep.subr.bf16.mxu0 %v796
    %1213 = vmatpush1.bf16.msra.mxu0 %v795
    %1214 = vmatprep.subr.bf16.mxu0 %v800
    %1215 = vmatpush1.bf16.msra.mxu0 %v799
    %1216 = vmatprep.subr.bf16.mxu0 %v804
    %1217 = vmatpush1.bf16.msra.mxu0 %v803
    %1218 = vmatprep.subr.bf16.mxu0 %v808
    %1219 = vmatpush1.bf16.msra.mxu0 %v807
    %1220 = vmatprep.mubr.bf16.mxu0 %v256
    %1221 = vmatmul.mubr.bf16.gmra.mrb[0].mxu0 %v255
    %v1222 = vpop.f32.mrb[0].mxu0
    %v1223 = vadd.f32 %v238, %v1222
    %v1224 = vpop.f32.mrb[0].mxu0
    %v1225 = vadd.f32 %v242, %v1224
    %v1226 = vpop.f32.mrb[0].mxu0
    %v1227 = vpop.f32.mrb[0].mxu0
    %1228 = vdwg.mxu0
    %1229 = vmatprep.subr.bf16.mxu0 %v812
    %1230 = vmatpush1.bf16.msra.mxu0 %v811
    %1231 = vmatprep.subr.bf16.mxu0 %v816
    %1232 = vmatpush1.bf16.msra.mxu0 %v815
    %1233 = vmatprep.subr.bf16.mxu0 %v820
    %1234 = vmatpush1.bf16.msra.mxu0 %v819
    %1235 = vmatprep.subr.bf16.mxu0 %v824
    %1236 = vmatpush1.bf16.msra.mxu0 %v823
    %1237 = vmatprep.subr.bf16.mxu0 %v828
    %1238 = vmatpush1.bf16.msra.mxu0 %v827
    %1239 = vmatprep.subr.bf16.mxu0 %v832
    %1240 = vmatpush1.bf16.msra.mxu0 %v831
    %1241 = vmatprep.subr.bf16.mxu0 %v836
    %1242 = vmatpush1.bf16.msra.mxu0 %v835
    %1243 = vmatprep.subr.bf16.mxu0 %v840
    %1244 = vmatpush1.bf16.msra.mxu0 %v839
    %1245 = vmatprep.subr.bf16.mxu0 %v844
    %1246 = vmatpush1.bf16.msra.mxu0 %v843
    %1247 = vmatprep.subr.bf16.mxu0 %v848
    %1248 = vmatpush1.bf16.msra.mxu0 %v847
    %1249 = vmatprep.subr.bf16.mxu0 %v852
    %1250 = vmatpush1.bf16.msra.mxu0 %v851
    %1251 = vmatprep.subr.bf16.mxu0 %v856
    %1252 = vmatpush1.bf16.msra.mxu0 %v855
    %1253 = vmatprep.subr.bf16.mxu0 %v860
    %1254 = vmatpush1.bf16.msra.mxu0 %v859
    %1255 = vmatprep.subr.bf16.mxu0 %v864
    %1256 = vmatpush1.bf16.msra.mxu0 %v863
    %1257 = vmatprep.subr.bf16.mxu0 %v868
    %1258 = vmatpush1.bf16.msra.mxu0 %v867
    %1259 = vmatprep.subr.bf16.mxu0 %v872
    %1260 = vmatpush1.bf16.msra.mxu0 %v871
    %1261 = vmatprep.mubr.bf16.mxu0 %v258
    %1262 = vmatmul.mubr.bf16.gmra.mrb[0].mxu0 %v257
    %v1263 = vpop.f32.mrb[0].mxu0
    %v1264 = vadd.f32 %v1223, %v1263
    %v1265 = vpop.f32.mrb[0].mxu0
    %v1266 = vadd.f32 %v1225, %v1265
    %v1267 = vpop.f32.mrb[0].mxu0
    %v1268 = vpop.f32.mrb[0].mxu0
    %1269 = vdwg.mxu0
    %1270 = vmatprep.subr.bf16.mxu0 %v876
    %1271 = vmatpush1.bf16.msra.mxu0 %v875
    %1272 = vmatprep.subr.bf16.mxu0 %v880
    %1273 = vmatpush1.bf16.msra.mxu0 %v879
    %1274 = vmatprep.subr.bf16.mxu0 %v884
    %1275 = vmatpush1.bf16.msra.mxu0 %v883
    %1276 = vmatprep.subr.bf16.mxu0 %v888
    %1277 = vmatpush1.bf16.msra.mxu0 %v887
    %1278 = vmatprep.subr.bf16.mxu0 %v892
    %1279 = vmatpush1.bf16.msra.mxu0 %v891
    %1280 = vmatprep.subr.bf16.mxu0 %v896
    %1281 = vmatpush1.bf16.msra.mxu0 %v895
    %1282 = vmatprep.subr.bf16.mxu0 %v900
    %1283 = vmatpush1.bf16.msra.mxu0 %v899
    %1284 = vmatprep.subr.bf16.mxu0 %v904
    %1285 = vmatpush1.bf16.msra.mxu0 %v903
    %1286 = vmatprep.subr.bf16.mxu0 0
    %1287 = vmatpush1.bf16.msra.mxu0 0
    %1288 = vmatprep.subr.bf16.mxu0 0
    %1289 = vmatpush1.bf16.msra.mxu0 0
    %1290 = vmatprep.subr.bf16.mxu0 0
    %1291 = vmatpush1.bf16.msra.mxu0 0
    %1292 = vmatprep.subr.bf16.mxu0 0
    %1293 = vmatpush1.bf16.msra.mxu0 0
    %1294 = vmatprep.subr.bf16.mxu0 0
    %1295 = vmatpush1.bf16.msra.mxu0 0
    %1296 = vmatprep.subr.bf16.mxu0 0
    %1297 = vmatpush1.bf16.msra.mxu0 0
    %1298 = vmatprep.subr.bf16.mxu0 0
    %1299 = vmatpush1.bf16.msra.mxu0 0
    %1300 = vmatprep.subr.bf16.mxu0 0
    %1301 = vmatpush1.bf16.msra.mxu0 0
    %1302 = vmatprep.mubr.bf16.mxu0 0
    %1303 = vmatmul.mubr.bf16.gmra.mrb[0].mxu0 %v259
    %v1304 = vpop.f32.mrb[0].mxu0
    %v1305 = vadd.f32 %v1264, %v1304
    %v1306 = vpop.f32.mrb[0].mxu0
    %v1307 = vadd.f32 %v1266, %v1306
    %v1308 = vpop.f32.mrb[0].mxu0
    %v1309 = vpop.f32.mrb[0].mxu0
    %1310 = vdwg.mxu0
    %v1311 = vmax.f32 %v1182, 0.0
    %v1312 = vmax.f32 %v1184, 0.0
    %v1313 = vmax.f32 %v1305, 0.0
    %v1314 = vmax.f32 %v1307, 0.0
    %v1315 = vpack.c.bf16 %v1311, %v1311
    %v1316 = vpack.c.bf16 %v1312, %v1312
    %v1317 = vpack.c.bf16 %v1313, %v1313
    %v1318 = vpack.c.bf16 %v1314, %v1314
    %v1319 = vld [vmem:[#allocation5] sm:$0xf]
    %v1320 = vld [vmem:[#allocation5 + $0x4] sm:$0xf]
    %v1321 = vld [vmem:[#allocation5 + $0x8] sm:$0xf]
    %v1322 = vld [vmem:[#allocation5 + $0xc] sm:$0xf]
    %v1323 = vld [vmem:[#allocation5 + $0x10] sm:$0xf]
    %v1324 = vld [vmem:[#allocation5 + $0x14] sm:$0xf]
    %v1325 = vld [vmem:[#allocation5 + $0x18] sm:$0xf]
    %v1326 = vld [vmem:[#allocation5 + $0x1c] sm:$0xf]
    %v1327 = vld [vmem:[#allocation5 + $0x20] sm:$0xf]
    %v1328 = vld [vmem:[#allocation5 + $0x24] sm:$0xf]
    %v1329 = vld [vmem:[#allocation5 + $0x28] sm:$0xf]
    %v1330 = vld [vmem:[#allocation5 + $0x2c] sm:$0xf]
    %v1331 = vld [vmem:[#allocation5 + $0x30] sm:$0xf]
    %v1332 = vld [vmem:[#allocation5 + $0x34] sm:$0xf]
    %v1333 = vld [vmem:[#allocation5 + $0x38] sm:$0xf]
    %v1334 = vld [vmem:[#allocation5 + $0x3c] sm:$0xf]
    %v1335 = vld [vmem:[#allocation5 + $0x40] sm:$0xf]
    %v1336 = vld [vmem:[#allocation5 + $0x44] sm:$0xf]
    %v1337 = vld [vmem:[#allocation5 + $0x48] sm:$0xf]
    %v1338 = vld [vmem:[#allocation5 + $0x4c] sm:$0xf]
    %v1339 = vld [vmem:[#allocation5 + $0x50] sm:$0xf]
    %v1340 = vld [vmem:[#allocation5 + $0x54] sm:$0xf]
    %v1341 = vld [vmem:[#allocation5 + $0x58] sm:$0xf]
    %v1342 = vld [vmem:[#allocation5 + $0x5c] sm:$0xf]
    %v1343 = vld [vmem:[#allocation5 + $0x60] sm:$0xf]
    %v1344 = vld [vmem:[#allocation5 + $0x64] sm:$0xf]
    %v1345 = vld [vmem:[#allocation5 + $0x68] sm:$0xf]
    %v1346 = vld [vmem:[#allocation5 + $0x6c] sm:$0xf]
    %v1347 = vld [vmem:[#allocation5 + $0x70] sm:$0xf]
    %v1348 = vld [vmem:[#allocation5 + $0x74] sm:$0xf]
    %v1349 = vld [vmem:[#allocation5 + $0x78] sm:$0xf]
    %v1350 = vld [vmem:[#allocation5 + $0x7c] sm:$0xf]
    %v1351 = vld [vmem:[#allocation5 + $0x80] sm:$0xf]
    %v1352 = vld [vmem:[#allocation5 + $0x84] sm:$0xf]
    %v1353 = vld [vmem:[#allocation5 + $0x88] sm:$0xf]
    %v1354 = vld [vmem:[#allocation5 + $0x8c] sm:$0xf]
    %v1355 = vld [vmem:[#allocation5 + $0x90] sm:$0xf]
    %v1356 = vld [vmem:[#allocation5 + $0x94] sm:$0xf]
    %v1357 = vld [vmem:[#allocation5 + $0x98] sm:$0xf]
    %v1358 = vld [vmem:[#allocation5 + $0x9c] sm:$0xf]
    %v1359 = vld [vmem:[#allocation5 + $0xa0] sm:$0xf]
    %v1360 = vld [vmem:[#allocation5 + $0xa4] sm:$0xf]
    %v1361 = vld [vmem:[#allocation5 + $0xa8] sm:$0xf]
    %v1362 = vld [vmem:[#allocation5 + $0xac] sm:$0xf]
    %v1363 = vld [vmem:[#allocation5 + $0xb0] sm:$0xf]
    %v1364 = vld [vmem:[#allocation5 + $0xb4] sm:$0xf]
    %v1365 = vld [vmem:[#allocation5 + $0xb8] sm:$0xf]
    %v1366 = vld [vmem:[#allocation5 + $0xbc] sm:$0xf]
    %v1367 = vld [vmem:[#allocation5 + $0xc0] sm:$0xf]
    %v1368 = vld [vmem:[#allocation5 + $0xc4] sm:$0xf]
    %v1369 = vld [vmem:[#allocation5 + $0xc8] sm:$0xf]
    %v1370 = vld [vmem:[#allocation5 + $0xcc] sm:$0xf]
    %v1371 = vld [vmem:[#allocation5 + $0xd0] sm:$0xf]
    %v1372 = vld [vmem:[#allocation5 + $0xd4] sm:$0xf]
    %v1373 = vld [vmem:[#allocation5 + $0xd8] sm:$0xf]
    %v1374 = vld [vmem:[#allocation5 + $0xdc] sm:$0xf]
    %v1375 = vld [vmem:[#allocation5 + $0xe0] sm:$0xf]
    %v1376 = vld [vmem:[#allocation5 + $0xe4] sm:$0xf]
    %v1377 = vld [vmem:[#allocation5 + $0xe8] sm:$0xf]
    %v1378 = vld [vmem:[#allocation5 + $0xec] sm:$0xf]
    %v1379 = vld [vmem:[#allocation5 + $0xf0] sm:$0xf]
    %v1380 = vld [vmem:[#allocation5 + $0xf4] sm:$0xf]
    %v1381 = vld [vmem:[#allocation5 + $0xf8] sm:$0xf]
    %v1382 = vld [vmem:[#allocation5 + $0xfc] sm:$0xf]
    %v1383 = vld [vmem:[%s4] sm:$0x1]
    %v1385 = vlaneseq
    %v1386 = vshrl.u32 %v1385, 7
    %v1387 = vsub.s32 0, %v1386
    %v1388 = vrot.slane %v1383, %v1387
    %v1454 = vunpack.c.l.b16 %v1319
    %v1455 = vunpack.c.l.b16 %v1320
    %v1456 = vunpack.c.l.b16 %v1321
    %v1457 = vunpack.c.l.b16 %v1322
    %v1458 = vunpack.c.l.b16 %v1323
    %v1459 = vunpack.c.l.b16 %v1324
    %v1460 = vunpack.c.l.b16 %v1325
    %v1461 = vunpack.c.l.b16 %v1326
    %v1462 = vunpack.c.l.b16 %v1327
    %v1463 = vunpack.c.l.b16 %v1328
    %v1464 = vunpack.c.l.b16 %v1329
    %v1465 = vunpack.c.l.b16 %v1330
    %v1466 = vunpack.c.l.b16 %v1331
    %v1467 = vunpack.c.l.b16 %v1332
    %v1468 = vunpack.c.l.b16 %v1333
    %v1469 = vunpack.c.l.b16 %v1334
    %v1470 = vunpack.c.l.b16 %v1335
    %v1471 = vunpack.c.l.b16 %v1336
    %v1472 = vunpack.c.l.b16 %v1337
    %v1473 = vunpack.c.l.b16 %v1338
    %v1474 = vunpack.c.l.b16 %v1339
    %v1475 = vunpack.c.l.b16 %v1340
    %v1476 = vunpack.c.l.b16 %v1341
    %v1477 = vunpack.c.l.b16 %v1342
    %v1478 = vunpack.c.l.b16 %v1343
    %v1479 = vunpack.c.l.b16 %v1344
    %v1480 = vunpack.c.l.b16 %v1345
    %v1481 = vunpack.c.l.b16 %v1346
    %v1482 = vunpack.c.l.b16 %v1347
    %v1483 = vunpack.c.l.b16 %v1348
    %v1484 = vunpack.c.l.b16 %v1349
    %v1485 = vunpack.c.l.b16 %v1350
    %v1486 = vunpack.c.l.b16 %v1351
    %v1487 = vunpack.c.l.b16 %v1352
    %v1488 = vunpack.c.l.b16 %v1353
    %v1489 = vunpack.c.l.b16 %v1354
    %v1490 = vunpack.c.l.b16 %v1355
    %v1491 = vunpack.c.l.b16 %v1356
    %v1492 = vunpack.c.l.b16 %v1357
    %v1493 = vunpack.c.l.b16 %v1358
    %v1494 = vunpack.c.l.b16 %v1359
    %v1495 = vunpack.c.l.b16 %v1360
    %v1496 = vunpack.c.l.b16 %v1361
    %v1497 = vunpack.c.l.b16 %v1362
    %v1498 = vunpack.c.l.b16 %v1363
    %v1499 = vunpack.c.l.b16 %v1364
    %v1500 = vunpack.c.l.b16 %v1365
    %v1501 = vunpack.c.l.b16 %v1366
    %v1502 = vunpack.c.l.b16 %v1367
    %v1503 = vunpack.c.l.b16 %v1368
    %v1504 = vunpack.c.l.b16 %v1369
    %v1505 = vunpack.c.l.b16 %v1370
    %v1506 = vunpack.c.l.b16 %v1371
    %v1507 = vunpack.c.l.b16 %v1372
    %v1508 = vunpack.c.l.b16 %v1373
    %v1509 = vunpack.c.l.b16 %v1374
    %v1510 = vunpack.c.l.b16 %v1375
    %v1511 = vunpack.c.l.b16 %v1376
    %v1512 = vunpack.c.l.b16 %v1377
    %v1513 = vunpack.c.l.b16 %v1378
    %v1514 = vunpack.c.l.b16 %v1379
    %v1515 = vunpack.c.l.b16 %v1380
    %v1516 = vunpack.c.l.b16 %v1381
    %v1517 = vunpack.c.l.b16 %v1382
    %v1518 = vpack.c.b16 %v1455, %v1454
    %v1519 = vpack.c.b16 %v1457, %v1456
    %v1520 = vpack.c.b16 %v1459, %v1458
    %v1521 = vpack.c.b16 %v1461, %v1460
    %v1522 = vpack.c.b16 %v1463, %v1462
    %v1523 = vpack.c.b16 %v1465, %v1464
    %v1524 = vpack.c.b16 %v1467, %v1466
    %v1525 = vpack.c.b16 %v1469, %v1468
    %v1526 = vpack.c.b16 %v1471, %v1470
    %v1527 = vpack.c.b16 %v1473, %v1472
    %v1528 = vpack.c.b16 %v1475, %v1474
    %v1529 = vpack.c.b16 %v1477, %v1476
    %v1530 = vpack.c.b16 %v1479, %v1478
    %v1531 = vpack.c.b16 %v1481, %v1480
    %v1532 = vpack.c.b16 %v1483, %v1482
    %v1533 = vpack.c.b16 %v1485, %v1484
    %v1534 = vpack.c.b16 %v1487, %v1486
    %v1535 = vpack.c.b16 %v1489, %v1488
    %v1536 = vpack.c.b16 %v1491, %v1490
    %v1537 = vpack.c.b16 %v1493, %v1492
    %v1538 = vpack.c.b16 %v1495, %v1494
    %v1539 = vpack.c.b16 %v1497, %v1496
    %v1540 = vpack.c.b16 %v1499, %v1498
    %v1541 = vpack.c.b16 %v1501, %v1500
    %v1542 = vpack.c.b16 %v1503, %v1502
    %v1543 = vpack.c.b16 %v1505, %v1504
    %v1544 = vpack.c.b16 %v1507, %v1506
    %v1545 = vpack.c.b16 %v1509, %v1508
    %v1546 = vpack.c.b16 %v1511, %v1510
    %v1547 = vpack.c.b16 %v1513, %v1512
    %v1548 = vpack.c.b16 %v1515, %v1514
    %v1549 = vpack.c.b16 %v1517, %v1516
    %1582 = vmatprep.subr.bf16.mxu0 0
    %1583 = vmatpush1.bf16.msra.mxu0 %v1518
    %1584 = vmatprep.subr.bf16.mxu0 0
    %1585 = vmatpush1.bf16.msra.mxu0 %v1519
    %1586 = vmatprep.subr.bf16.mxu0 0
    %1587 = vmatpush1.bf16.msra.mxu0 %v1520
    %1588 = vmatprep.subr.bf16.mxu0 0
    %1589 = vmatpush1.bf16.msra.mxu0 %v1521
    %1590 = vmatprep.subr.bf16.mxu0 0
    %1591 = vmatpush1.bf16.msra.mxu0 %v1522
    %1592 = vmatprep.subr.bf16.mxu0 0
    %1593 = vmatpush1.bf16.msra.mxu0 %v1523
    %1594 = vmatprep.subr.bf16.mxu0 0
    %1595 = vmatpush1.bf16.msra.mxu0 %v1524
    %1596 = vmatprep.subr.bf16.mxu0 0
    %1597 = vmatpush1.bf16.msra.mxu0 %v1525
    %1598 = vmatprep.subr.bf16.mxu0 0
    %1599 = vmatpush1.bf16.msra.mxu0 %v1526
    %1600 = vmatprep.subr.bf16.mxu0 0
    %1601 = vmatpush1.bf16.msra.mxu0 %v1527
    %1602 = vmatprep.subr.bf16.mxu0 0
    %1603 = vmatpush1.bf16.msra.mxu0 %v1528
    %1604 = vmatprep.subr.bf16.mxu0 0
    %1605 = vmatpush1.bf16.msra.mxu0 %v1529
    %1606 = vmatprep.subr.bf16.mxu0 0
    %1607 = vmatpush1.bf16.msra.mxu0 %v1530
    %1608 = vmatprep.subr.bf16.mxu0 0
    %1609 = vmatpush1.bf16.msra.mxu0 %v1531
    %1610 = vmatprep.subr.bf16.mxu0 0
    %1611 = vmatpush1.bf16.msra.mxu0 %v1532
    %1612 = vmatprep.subr.bf16.mxu0 0
    %1613 = vmatpush1.bf16.msra.mxu0 %v1533
    %1614 = vmatprep.mubr.bf16.mxu0 %v1316
    %1615 = vmatmul.mubr.bf16.gmra.mrb[0].mxu0 %v1315
    %v1616 = vpop.f32.mrb[0].mxu0
    %v1617 = vadd.f32 %v1388, %v1616
    %v1618 = vpop.f32.mrb[0].mxu0
    %v1619 = vpop.f32.mrb[0].mxu0
    %v1620 = vpop.f32.mrb[0].mxu0
    %1621 = vdwg.mxu0
    %1622 = vmatprep.subr.bf16.mxu0 0
    %1623 = vmatpush1.bf16.msra.mxu0 %v1534
    %1624 = vmatprep.subr.bf16.mxu0 0
    %1625 = vmatpush1.bf16.msra.mxu0 %v1535
    %1626 = vmatprep.subr.bf16.mxu0 0
    %1627 = vmatpush1.bf16.msra.mxu0 %v1536
    %1628 = vmatprep.subr.bf16.mxu0 0
    %1629 = vmatpush1.bf16.msra.mxu0 %v1537
    %1630 = vmatprep.subr.bf16.mxu0 0
    %1631 = vmatpush1.bf16.msra.mxu0 %v1538
    %1632 = vmatprep.subr.bf16.mxu0 0
    %1633 = vmatpush1.bf16.msra.mxu0 %v1539
    %1634 = vmatprep.subr.bf16.mxu0 0
    %1635 = vmatpush1.bf16.msra.mxu0 %v1540
    %1636 = vmatprep.subr.bf16.mxu0 0
    %1637 = vmatpush1.bf16.msra.mxu0 %v1541
    %1638 = vmatprep.subr.bf16.mxu0 0
    %1639 = vmatpush1.bf16.msra.mxu0 %v1542
    %1640 = vmatprep.subr.bf16.mxu0 0
    %1641 = vmatpush1.bf16.msra.mxu0 %v1543
    %1642 = vmatprep.subr.bf16.mxu0 0
    %1643 = vmatpush1.bf16.msra.mxu0 %v1544
    %1644 = vmatprep.subr.bf16.mxu0 0
    %1645 = vmatpush1.bf16.msra.mxu0 %v1545
    %1646 = vmatprep.subr.bf16.mxu0 0
    %1647 = vmatpush1.bf16.msra.mxu0 %v1546
    %1648 = vmatprep.subr.bf16.mxu0 0
    %1649 = vmatpush1.bf16.msra.mxu0 %v1547
    %1650 = vmatprep.subr.bf16.mxu0 0
    %1651 = vmatpush1.bf16.msra.mxu0 %v1548
    %1652 = vmatprep.subr.bf16.mxu0 0
    %1653 = vmatpush1.bf16.msra.mxu0 %v1549
    %1654 = vmatprep.mubr.bf16.mxu0 %v1318
    %1655 = vmatmul.mubr.bf16.gmra.mrb[0].mxu0 %v1317
    %v1656 = vpop.f32.mrb[0].mxu0
    %v1657 = vadd.f32 %v1617, %v1656
    %v1658 = vpop.f32.mrb[0].mxu0
    %v1659 = vpop.f32.mrb[0].mxu0
    %v1660 = vpop.f32.mrb[0].mxu0
    %1661 = vdwg.mxu0
    %v1662 = vmax.f32 %v1657, 0.0
    %v1663 = vpack.c.bf16 %v1662, %v1662
    %v1664 = vld [vmem:[%s5] sm:$0xf]
    %v1665 = vld [vmem:[%s5 + $0x4] sm:$0xf]
    %v1666 = vld [vmem:[%s5 + $0x8] sm:$0xf]
    %v1667 = vld [vmem:[%s5 + $0xc] sm:$0xf]
    %v1668 = vld [vmem:[%s5 + $0x10] sm:$0xf]
    %v1669 = vld [vmem:[%s5 + $0x14] sm:$0xf]
    %v1670 = vld [vmem:[%s5 + $0x18] sm:$0xf]
    %v1671 = vld [vmem:[%s5 + $0x1c] sm:$0xf]
    %v1672 = vld [vmem:[%s5 + $0x20] sm:$0xf]
    %v1673 = vld [vmem:[%s5 + $0x24] sm:$0xf]
    %v1674 = vld [vmem:[%s5 + $0x28] sm:$0xf]
    %v1675 = vld [vmem:[%s5 + $0x2c] sm:$0xf]
    %v1676 = vld [vmem:[%s5 + $0x30] sm:$0xf]
    %v1677 = vld [vmem:[%s5 + $0x34] sm:$0xf]
    %v1678 = vld [vmem:[%s5 + $0x38] sm:$0xf]
    %v1679 = vld [vmem:[%s5 + $0x3c] sm:$0xf]
    %v1680 = vld [vmem:[%s6] sm:$0x1]
    %v1682 = vlaneseq
    %v1683 = vshrl.u32 %v1682, 7
    %v1684 = vsub.s32 0, %v1683
    %v1685 = vrot.slane %v1680, %v1684
    %v1703 = vunpack.c.l.b16 %v1664
    %v1704 = vunpack.c.l.b16 %v1665
    %v1705 = vunpack.c.l.b16 %v1666
    %v1706 = vunpack.c.l.b16 %v1667
    %v1707 = vunpack.c.l.b16 %v1668
    %v1708 = vunpack.c.l.b16 %v1669
    %v1709 = vunpack.c.l.b16 %v1670
    %v1710 = vunpack.c.l.b16 %v1671
    %v1711 = vunpack.c.l.b16 %v1672
    %v1712 = vunpack.c.l.b16 %v1673
    %v1713 = vunpack.c.l.b16 %v1674
    %v1714 = vunpack.c.l.b16 %v1675
    %v1715 = vunpack.c.l.b16 %v1676
    %v1716 = vunpack.c.l.b16 %v1677
    %v1717 = vunpack.c.l.b16 %v1678
    %v1718 = vunpack.c.l.b16 %v1679
    %v1719 = vpack.c.b16 %v1704, %v1703
    %v1720 = vpack.c.b16 %v1706, %v1705
    %v1721 = vpack.c.b16 %v1708, %v1707
    %v1722 = vpack.c.b16 %v1710, %v1709
    %v1723 = vpack.c.b16 %v1712, %v1711
    %v1724 = vpack.c.b16 %v1714, %v1713
    %v1725 = vpack.c.b16 %v1716, %v1715
    %v1726 = vpack.c.b16 %v1718, %v1717
    %1735 = vmatprep.subr.bf16.mxu0 0
    %1736 = vmatpush1.bf16.msra.mxu0 %v1719
    %1737 = vmatprep.subr.bf16.mxu0 0
    %1738 = vmatpush1.bf16.msra.mxu0 %v1720
    %1739 = vmatprep.subr.bf16.mxu0 0
    %1740 = vmatpush1.bf16.msra.mxu0 %v1721
    %1741 = vmatprep.subr.bf16.mxu0 0
    %1742 = vmatpush1.bf16.msra.mxu0 %v1722
    %1743 = vmatprep.subr.bf16.mxu0 0
    %1744 = vmatpush1.bf16.msra.mxu0 %v1723
    %1745 = vmatprep.subr.bf16.mxu0 0
    %1746 = vmatpush1.bf16.msra.mxu0 %v1724
    %1747 = vmatprep.subr.bf16.mxu0 0
    %1748 = vmatpush1.bf16.msra.mxu0 %v1725
    %1749 = vmatprep.subr.bf16.mxu0 0
    %1750 = vmatpush1.bf16.msra.mxu0 %v1726
    %1751 = vmatprep.subr.bf16.mxu0 0
    %1752 = vmatpush1.bf16.msra.mxu0 0
    %1753 = vmatprep.subr.bf16.mxu0 0
    %1754 = vmatpush1.bf16.msra.mxu0 0
    %1755 = vmatprep.subr.bf16.mxu0 0
    %1756 = vmatpush1.bf16.msra.mxu0 0
    %1757 = vmatprep.subr.bf16.mxu0 0
    %1758 = vmatpush1.bf16.msra.mxu0 0
    %1759 = vmatprep.subr.bf16.mxu0 0
    %1760 = vmatpush1.bf16.msra.mxu0 0
    %1761 = vmatprep.subr.bf16.mxu0 0
    %1762 = vmatpush1.bf16.msra.mxu0 0
    %1763 = vmatprep.subr.bf16.mxu0 0
    %1764 = vmatpush1.bf16.msra.mxu0 0
    %1765 = vmatprep.subr.bf16.mxu0 0
    %1766 = vmatpush1.bf16.msra.mxu0 0
    %1767 = vmatprep.mubr.bf16.mxu0 0
    %1768 = vmatmul.mubr.bf16.gmra.mrb[0].mxu0 %v1663
    %v1769 = vpop.f32.mrb[0].mxu0
    %v1770 = vadd.f32 %v1685, %v1769
    %v1771 = vpop.f32.mrb[0].mxu0
    %v1772 = vpop.f32.mrb[0].mxu0
    %v1773 = vpop.f32.mrb[0].mxu0
    %1774 = vdwg.mxu0
    %v1775 = vmax.f32 %v1770, 0.0
    %v1776 = vpack.c.bf16 %v1775, %v1775
    %v1777 = vld [vmem:[%s7] sm:$0xf]
    %v1778 = vld [vmem:[%s7 + $0x4] sm:$0xf]
    %v1779 = vld [vmem:[%s7 + $0x8] sm:$0xf]
    %v1780 = vld [vmem:[%s7 + $0xc] sm:$0xf]
    %v1781 = vld [vmem:[%s8] sm:$0x1]
    %v1783 = vlaneseq
    %v1784 = vshrl.u32 %v1783, 7
    %v1785 = vsub.s32 0, %v1784
    %v1786 = vrot.slane %v1781, %v1785
    %v1792 = vunpack.c.l.b16 %v1777
    %v1793 = vunpack.c.l.b16 %v1778
    %v1794 = vunpack.c.l.b16 %v1779
    %v1795 = vunpack.c.l.b16 %v1780
    %v1796 = vpack.c.b16 %v1793, %v1792
    %v1797 = vpack.c.b16 %v1795, %v1794
    %vm1800 = vcmask 261120
    %v1802 = vsel %vm1800, %v1776, 0
    %1804 = vmatprep.subr.bf16.mxu0 0
    %1805 = vmatpush1.bf16.msra.mxu0 %v1796
    %1806 = vmatprep.subr.bf16.mxu0 0
    %1807 = vmatpush1.bf16.msra.mxu0 %v1797
    %1808 = vmatprep.subr.bf16.mxu0 0
    %1809 = vmatpush1.bf16.msra.mxu0 0
    %1810 = vmatprep.subr.bf16.mxu0 0
    %1811 = vmatpush1.bf16.msra.mxu0 0
    %1812 = vmatprep.subr.bf16.mxu0 0
    %1813 = vmatpush1.bf16.msra.mxu0 0
    %1814 = vmatprep.subr.bf16.mxu0 0
    %1815 = vmatpush1.bf16.msra.mxu0 0
    %1816 = vmatprep.subr.bf16.mxu0 0
    %1817 = vmatpush1.bf16.msra.mxu0 0
    %1818 = vmatprep.subr.bf16.mxu0 0
    %1819 = vmatpush1.bf16.msra.mxu0 0
    %1820 = vmatprep.subr.bf16.mxu0 0
    %1821 = vmatpush1.bf16.msra.mxu0 0
    %1822 = vmatprep.subr.bf16.mxu0 0
    %1823 = vmatpush1.bf16.msra.mxu0 0
    %1824 = vmatprep.subr.bf16.mxu0 0
    %1825 = vmatpush1.bf16.msra.mxu0 0
    %1826 = vmatprep.subr.bf16.mxu0 0
    %1827 = vmatpush1.bf16.msra.mxu0 0
    %1828 = vmatprep.subr.bf16.mxu0 0
    %1829 = vmatpush1.bf16.msra.mxu0 0
    %1830 = vmatprep.subr.bf16.mxu0 0
    %1831 = vmatpush1.bf16.msra.mxu0 0
    %1832 = vmatprep.subr.bf16.mxu0 0
    %1833 = vmatpush1.bf16.msra.mxu0 0
    %1834 = vmatprep.subr.bf16.mxu0 0
    %1835 = vmatpush1.bf16.msra.mxu0 0
    %1836 = vmatprep.mubr.bf16.mxu0 0
    %1837 = vmatmul.mubr.bf16.gmra.mrb[0].mxu0 %v1802
    %v1838 = vpop.f32.mrb[0].mxu0
    %v1839 = vadd.f32 %v1786, %v1838
    %v1840 = vpop.f32.mrb[0].mxu0
    %v1841 = vpop.f32.mrb[0].mxu0
    %v1842 = vpop.f32.mrb[0].mxu0
    %1843 = vdwg.mxu0
    %v1844 = vmax.f32 %v1839, 0.0
    %vm1845 = vcmask 48128
    %v1846 = vsel %vm1845, %v1844, -inf
    %1847 = vmax.xlane.f32.xlu0 %v1846
    %v1848 = vpop.xlane.xlu0 %1847
    %v1849 = vsub.f32 %v1844, %v1848
    %v1850 = vmul.f32 %v1849, 1.442695
    %v1851 = vpow.pop %v1850
    %v1852 = vsel %vm1845, %v1851, 0.0
    %1853 = vadd.xlane.f32.xlu0 %v1852
    %v1854 = vpop.xlane.xlu0 %1853
    %v1855 = vrcp.pop %v1854
    %v1856 = vmul.f32 %v1851, %v1855
    %1857 = vst.msk [vmem:[#allocation7] sm:$0xff] %vm1845, %v1856
    // Predicated region
    $region46: #{tpu_custom_call.1} parent=1 // pred_check
      _
    $region47: #{tpu_custom_call.1} parent=1 // pred_check_branch
      %1859 = sbr.rel (0) target = $region49
    $region48: #{tpu_custom_call.1} parent=1 // pred_region
      %s1861 = ssub.s32 128, 128
      %1862 = vsyncadd [#allocation4], %s1861
      %s1864 = sshll.u32 [#allocation7], 4
      %s1865 = int_to_ptr.vmem [resolvable:$true] %s1864
      %1867 = dma.vmem_to_hbm [thread:$0]  %s1865, 128, %s9, [#allocation4]
    $region49: #{tpu_custom_call.1} parent=1 // pred_fallthru
      _
    // Predicated region
    $region50: #{tpu_custom_call.1} parent=1 // pred_check
      _
    $region51: #{tpu_custom_call.1} parent=1 // pred_check_branch
      %1869 = sbr.rel (0) target = $region53
    $region52: #{tpu_custom_call.1} parent=1 // pred_region
      %1870 = dma.done [#allocation4], 128
    $region53: #{tpu_custom_call.1} parent=1 // pred_fallthru
      _
    %1871 = vsyncpa [#allocation3], 1
    %1872 = vsyncpa [#allocation6], 1
    %1873 = vsyncpa [#allocation4], 1

</llo_original>
